<compile_context>
chip_gen: v7x
topology: tpu7x:2x2x1
jax: 0.10.0
libtpu: 0.0.40
codegen_flags: <defaults>
</compile_context>

<pallas_src>
import functools

import jax
import jax.numpy as jnp
from jax.experimental import pallas as pl
from jax.experimental.pallas import tpu as pltpu


def _self_attention_kernel(
    x_ref, gamma_ref, beta_ref, b_o_ref,            # blocked / small inputs
    w_q_hbm, w_kv_hbm, w_o_hbm,                     # un-blocked (pl.ANY) weights
    o_ref,                                          # output tile
    xn_ref, k_ref, v_ref, wq_ref, wkv_ref, wo_ref,  # persistent VMEM scratch
    w_sem,                                          # DMA semaphores for weight copies
    *, n, q_tile, k_tile, n_heads, head_dim, compute_dtype):
  inner = n_heads * head_dim
  nq_pad = xn_ref.shape[0]
  nk_pad = k_ref.shape[1]
  num_k = nk_pad // k_tile
  qi = pl.program_id(1)

  @pl.when(qi == 0)
  def _prologue():
    # Single-buffered weight residency: manual DMAs (once per batch element) instead of
    # the pipeline's double-buffered copies; overlapped with the LayerNorm below.
    cp_q = pltpu.make_async_copy(w_q_hbm, wq_ref, w_sem.at[0])
    cp_kv = pltpu.make_async_copy(w_kv_hbm, wkv_ref, w_sem.at[1])
    cp_o = pltpu.make_async_copy(w_o_hbm, wo_ref, w_sem.at[2])
    cp_q.start(); cp_kv.start(); cp_o.start()

    # LayerNorm over the full sequence (f32, eps=1e-5, biased variance), once/batch.
    x = x_ref[0].astype(jnp.float32)                                    # (n, dim)
    mean = jnp.mean(x, axis=-1, keepdims=True)
    var = jnp.mean(jnp.square(x - mean), axis=-1, keepdims=True)
    xn = (x - mean) * jax.lax.rsqrt(var + 1e-5)
    xn = xn * gamma_ref[...].astype(jnp.float32) + beta_ref[...].astype(jnp.float32)
    xn = xn.astype(compute_dtype)

    if nq_pad != n:                                 # zero only the pad tail
      xn_ref[pl.ds(n, nq_pad - n), :] = jnp.zeros(
          (nq_pad - n, xn.shape[-1]), compute_dtype)
    xn_ref[pl.ds(0, n), :] = xn

    # Fused, lane-dense K|V projection: (n, dim) @ (dim, 2*inner) on the MXU.
    cp_kv.wait()
    kv = jnp.dot(xn, wkv_ref[...], preferred_element_type=jnp.float32)
    kv = kv.astype(compute_dtype)                   # (n, 2*inner)

    if nk_pad != n:                                 # zero only the key pad tail
      zpad = jnp.zeros((n_heads, nk_pad - n, head_dim), compute_dtype)
      k_ref[:, pl.ds(n, nk_pad - n), :] = zpad
      v_ref[:, pl.ds(n, nk_pad - n), :] = zpad
    # Head split: static lane slices of the fused projection, once per batch element.
    for h in range(n_heads):
      k_ref[h, pl.ds(0, n), :] = kv[:, h * head_dim:(h + 1) * head_dim]
      v_ref[h, pl.ds(0, n), :] = kv[:, inner + h * head_dim:inner + (h + 1) * head_dim]

    cp_q.wait(); cp_o.wait()

  # ---------------- per-query-tile attention ----------------
  q_start = pl.multiple_of(qi * q_tile, q_tile)
  xq = xn_ref[pl.ds(q_start, q_tile), :]                                # (tq, dim)

  # Fused, lane-dense Q projection (softmax scale folded into W_q wrapper-side).
  q_flat = jnp.dot(xq, wq_ref[...], preferred_element_type=jnp.float32)
  q_flat = q_flat.astype(compute_dtype)                                 # (tq, inner)
  q_h = jnp.stack(
      [q_flat[:, h * head_dim:(h + 1) * head_dim] for h in range(n_heads)], axis=0)

  def kv_step(ki, carry):
    m, l, acc = carry
    ks = ki * k_tile
    if not isinstance(ks, int):
      ks = pl.multiple_of(ks, k_tile)
    kh = k_ref[:, pl.ds(ks, k_tile), :]                                 # (h, tk, d)
    vh = v_ref[:, pl.ds(ks, k_tile), :]
    s = jnp.einsum('hqd,hkd->hqk', q_h, kh,
                   preferred_element_type=jnp.float32)                  # (h, tq, tk)
    if nk_pad != n:                                 # mask zero-padded key rows
      key_id = jax.lax.broadcasted_iota(jnp.int32, (1, 1, k_tile), 2) + ks
      s = jnp.where(key_id < n, s, -jnp.inf)
    m_new = jnp.maximum(m, jnp.max(s, axis=-1, keepdims=True))
    alpha = jnp.exp(m - m_new)
    p = jnp.exp(s - m_new)                          # f32 exp (safe on v5e as well)
    l_new = alpha * l + jnp.sum(p, axis=-1, keepdims=True)
    acc_new = alpha * acc + jnp.einsum(
        'hqk,hkd->hqd', p.astype(compute_dtype), vh,
        preferred_element_type=jnp.float32)
    return m_new, l_new, acc_new

  carry0 = (jnp.full((n_heads, q_tile, 1), -jnp.inf, jnp.float32),
            jnp.zeros((n_heads, q_tile, 1), jnp.float32),
            jnp.zeros((n_heads, q_tile, head_dim), jnp.float32))
  if num_k == 1:
    m, l, acc = kv_step(0, carry0)
  else:
    m, l, acc = jax.lax.fori_loop(0, num_k, kv_step, carry0, unroll=(num_k <= 4))

  # Normalize on the small (h, tq, d) tensor (approx EUP reciprocal on the bf16 path,
  # exact reciprocal on the f32 path).
  ctx = acc * pl.reciprocal(l, approx=(compute_dtype != jnp.float32))
  ctx = ctx.astype(compute_dtype)

  # Merge heads (static lane concat) and do one lane-dense output projection.
  ctx_flat = jnp.concatenate([ctx[h] for h in range(n_heads)], axis=-1)  # (tq, inner)
  y = jnp.dot(ctx_flat, wo_ref[...], preferred_element_type=jnp.float32)
  y = y + b_o_ref[...].astype(jnp.float32)                               # (tq, dim)
  o_ref[0] = y.astype(o_ref.dtype)


def _vmem_capacity_bytes():
  try:
    return int(pltpu.get_tpu_info().vmem_capacity_bytes)
  except Exception:
    return 128 * 1024 * 1024   # conservative default (v5e/v6e-class)


def self_attention(x, gamma, beta, w_qkv, w_out, b_out, *, n_heads, head_dim,
                   q_tile=None, k_tile=None, compute_dtype=jnp.bfloat16):
  """Pallas _SelfAttention forward.

  Weight layout: w_qkv is (dim, 3*inner) = [W_q | W_k | W_v] and w_out is (inner, dim),
  i.e. already transposed so the kernel computes x @ W (+ b).  Inference mode.
  """
  b, n, dim = x.shape
  inner = n_heads * head_dim
  assert w_qkv.shape == (dim, 3 * inner)
  assert w_out.shape == (inner, dim)
  compute_dtype = jnp.dtype(compute_dtype)

  # Per-generation VMEM budgeting (v7x: 64 MiB physical; v5e/v6e: 128 MiB).
  vmem_cap = _vmem_capacity_bytes()
  small_vmem = vmem_cap <= 64 * 1024 * 1024
  vmem_limit = min(int(vmem_cap * 3 // 4), 100 * 1024 * 1024)

  if q_tile is None:
    q_tile = n if n <= 256 else (128 if small_vmem else 256)
  if k_tile is None:
    k_tile = n if n <= 512 else (256 if small_vmem else 512)
  num_q = pl.cdiv(n, q_tile)
  num_k = pl.cdiv(n, k_tile)
  nq_pad = num_q * q_tile
  nk_pad = num_k * k_tile

  # One-time weight prep: fold the softmax scale into W_q, fuse W_k|W_v, and cast to
  # the MXU operand dtype.
  scale = float(head_dim) ** -0.5
  w_q, w_k, w_v = jnp.split(w_qkv, 3, axis=-1)
  w_q = (w_q * scale).astype(compute_dtype)                            # (dim, inner)
  w_kv = jnp.concatenate([w_k, w_v], axis=-1).astype(compute_dtype)    # (dim, 2*inner)
  w_o = w_out.astype(compute_dtype)                                    # (inner, dim)

  kernel = functools.partial(
      _self_attention_kernel, n=n, q_tile=q_tile, k_tile=k_tile,
      n_heads=n_heads, head_dim=head_dim, compute_dtype=compute_dtype)

  return pl.pallas_call(
      kernel,
      out_shape=jax.ShapeDtypeStruct((b, n, dim), x.dtype),
      grid=(b, num_q),
      in_specs=[
          # x: full sequence per batch; constant over qi => one DMA per batch element.
          pl.BlockSpec((1, n, dim), lambda bi, qi: (bi, 0, 0)),
          pl.BlockSpec((1, dim), lambda bi, qi: (0, 0)),               # gamma
          pl.BlockSpec((1, dim), lambda bi, qi: (0, 0)),               # beta
          pl.BlockSpec((1, dim), lambda bi, qi: (0, 0)),               # output bias
          pl.BlockSpec(memory_space=pl.ANY),                           # W_q (scaled)
          pl.BlockSpec(memory_space=pl.ANY),                           # W_k|W_v fused
          pl.BlockSpec(memory_space=pl.ANY),                           # W_out
      ],
      out_specs=pl.BlockSpec((1, q_tile, dim), lambda bi, qi: (bi, qi, 0)),
      scratch_shapes=[
          pltpu.VMEM((nq_pad, dim), compute_dtype),                    # LayerNorm(x)
          pltpu.VMEM((n_heads, nk_pad, head_dim), compute_dtype),      # K heads
          pltpu.VMEM((n_heads, nk_pad, head_dim), compute_dtype),      # V heads
          pltpu.VMEM((dim, inner), compute_dtype),                     # W_q resident
          pltpu.VMEM((dim, 2 * inner), compute_dtype),                 # W_kv resident
          pltpu.VMEM((inner, dim), compute_dtype),                     # W_out resident
          pltpu.SemaphoreType.DMA((3,)),                               # weight-copy sems
      ],
      compiler_params=pltpu.CompilerParams(
          dimension_semantics=("parallel", "arbitrary"),
          vmem_limit_bytes=vmem_limit,
      ),
  )(x, gamma, beta, b_out, w_q, w_kv, w_o)


def _reference(x, gamma, beta, w_qkv, w_out, b_out, n_heads, head_dim):
  mean = jnp.mean(x, axis=-1, keepdims=True)
  var = jnp.mean((x - mean) ** 2, axis=-1, keepdims=True)
  xn = (x - mean) / jnp.sqrt(var + 1e-5) * gamma[0] + beta[0]
  qkv = xn @ w_qkv
  q, k, v = jnp.split(qkv, 3, axis=-1)

  def to_heads(t):
    bb, nn, _ = t.shape
    return t.reshape(bb, nn, n_heads, head_dim).transpose(0, 2, 1, 3)

  q, k, v = map(to_heads, (q, k, v))
  dots = jnp.einsum('bhqd,bhkd->bhqk', q, k) * float(head_dim) ** -0.5
  attn = jax.nn.softmax(dots, axis=-1)
  out = jnp.einsum('bhqk,bhkd->bhqd', attn, v)
  bb, hh, nn, dd = out.shape
  out = out.transpose(0, 2, 1, 3).reshape(bb, nn, hh * dd)
  return out @ w_out + b_out[0]


if __name__ == "__main__":
  key = jax.random.PRNGKey(0)
  kx, kg, kb, kqkv, kwo, kbo, kx2 = jax.random.split(key, 7)

  # -- Case 1: b=2, n=8, dim=32, 4 heads of size 8 (single q / k tile). --
  b, n, dim, n_heads, head_dim = 2, 8, 32, 4, 8
  inner = n_heads * head_dim

  x = jax.random.normal(kx, (b, n, dim), dtype=jnp.float32)
  gamma = 1.0 + 0.1 * jax.random.normal(kg, (1, dim), dtype=jnp.float32)
  beta = 0.1 * jax.random.normal(kb, (1, dim), dtype=jnp.float32)
  w_qkv = 0.1 * jax.random.normal(kqkv, (dim, 3 * inner), dtype=jnp.float32)
  w_out = 0.1 * jax.random.normal(kwo, (inner, dim), dtype=jnp.float32)
  b_out = 0.1 * jax.random.normal(kbo, (1, dim), dtype=jnp.float32)

  ref = _reference(x, gamma, beta, w_qkv, w_out, b_out, n_heads, head_dim)

  # Default path: bf16 MXU operands, f32 LayerNorm / softmax / accumulation.
  out = jax.block_until_ready(
      self_attention(x, gamma, beta, w_qkv, w_out, b_out,
                     n_heads=n_heads, head_dim=head_dim))
  assert out.shape == (b, n, dim)
  assert jnp.allclose(out, ref, rtol=5e-2, atol=5e-2), "bf16 mismatch vs reference"

  # Full-f32 path (exact reciprocal): matches the PyTorch module closely.
  out_f32 = jax.block_until_ready(
      self_attention(x, gamma, beta, w_qkv, w_out, b_out,
                     n_heads=n_heads, head_dim=head_dim,
                     compute_dtype=jnp.float32))
  assert jnp.allclose(out_f32, ref, rtol=2e-3, atol=2e-3), "f32 mismatch vs reference"

  # -- Case 2: n=24 with q_tile=16 / k_tile=16: exercises query-tile padding, key
  #    masking, and the multi-chunk online-softmax (flash) loop. --
  n2 = 24
  x2 = jax.random.normal(kx2, (1, n2, dim), dtype=jnp.float32)
  ref2 = _reference(x2, gamma, beta, w_qkv, w_out, b_out, n_heads, head_dim)
  out2 = jax.block_until_ready(
      self_attention(x2, gamma, beta, w_qkv, w_out, b_out,
                     n_heads=n_heads, head_dim=head_dim,
                     q_tile=16, k_tile=16, compute_dtype=jnp.float32))
  assert out2.shape == (1, n2, dim)
  assert jnp.allclose(out2, ref2, rtol=2e-3, atol=2e-3), \
      "padded/tiled mismatch vs reference"

  print("KERNEL_OK")
</pallas_src>

<mosaic_0001>
module attributes {stable_mosaic.version = 11 : i64} {
  func.func @_self_attention_kernel(%arg0: i32, %arg1: i32, %arg2: memref<1x8x32xf32, #tpu.memory_space<vmem>>, %arg3: memref<1x32xf32, #tpu.memory_space<vmem>>, %arg4: memref<1x32xf32, #tpu.memory_space<vmem>>, %arg5: memref<1x32xf32, #tpu.memory_space<vmem>>, %arg6: memref<32x32xbf16, #tpu.memory_space<any>>, %arg7: memref<32x64xbf16, #tpu.memory_space<any>>, %arg8: memref<32x32xbf16, #tpu.memory_space<any>>, %arg9: memref<1x8x32xf32, #tpu.memory_space<vmem>>, %arg10: memref<8x32xbf16, #tpu.memory_space<vmem>>, %arg11: memref<4x8x8xbf16, #tpu.memory_space<vmem>>, %arg12: memref<4x8x8xbf16, #tpu.memory_space<vmem>>, %arg13: memref<32x32xbf16, #tpu.memory_space<vmem>>, %arg14: memref<32x64xbf16, #tpu.memory_space<vmem>>, %arg15: memref<32x32xbf16, #tpu.memory_space<vmem>>, %arg16: memref<3x!tpu.dma_semaphore, #tpu.memory_space<semaphore_mem>>) attributes {dimension_semantics = [#tpu.dimension_semantics<parallel>, #tpu.dimension_semantics<arbitrary>], iteration_bounds = array<i64: 2, 1>, scalar_prefetch = 0 : i64, scratch_operands = 7 : i64, tpu.core_type = #tpu.core_type<tc>, window_params = [{transform_indices = @transform_0, window_bounds = array<i64: 1, 8, 32>}, {pipeline_mode = #tpu.pipeline_mode<synchronous>, transform_indices = @transform_1, window_bounds = array<i64: 1, 32>}, {pipeline_mode = #tpu.pipeline_mode<synchronous>, transform_indices = @transform_2, window_bounds = array<i64: 1, 32>}, {pipeline_mode = #tpu.pipeline_mode<synchronous>, transform_indices = @transform_3, window_bounds = array<i64: 1, 32>}, {}, {}, {}, {transform_indices = @transform_7, window_bounds = array<i64: 1, 8, 32>}]} {
    %c0_i32 = arith.constant 0 : i32
    %0 = arith.cmpi eq, %arg1, %c0_i32 : i32
    %1 = arith.extui %0 : i1 to i32
    %c0_i32_0 = arith.constant 0 : i32
    %2 = arith.cmpi ne, %1, %c0_i32_0 : i32
    scf.if %2 {
      %c0_i32_24 = arith.constant 0 : i32
      %63 = tpu.memref_slice %arg16[%c0_i32_24] : memref<3x!tpu.dma_semaphore, #tpu.memory_space<semaphore_mem>> -> memref<1x!tpu.dma_semaphore, #tpu.memory_space<semaphore_mem>>
      %64 = tpu.memref_squeeze %63 : memref<1x!tpu.dma_semaphore, #tpu.memory_space<semaphore_mem>> -> memref<!tpu.dma_semaphore, #tpu.memory_space<semaphore_mem>>
      tpu.enqueue_dma source(%arg6 : memref<32x32xbf16, #tpu.memory_space<any>>) target(%arg13 : memref<32x32xbf16, #tpu.memory_space<vmem>>) target_semaphore(%64 : memref<!tpu.dma_semaphore, #tpu.memory_space<semaphore_mem>>)
      %c1_i32 = arith.constant 1 : i32
      %65 = tpu.memref_slice %arg16[%c1_i32] : memref<3x!tpu.dma_semaphore, #tpu.memory_space<semaphore_mem>> -> memref<1x!tpu.dma_semaphore, #tpu.memory_space<semaphore_mem>>
      %66 = tpu.memref_squeeze %65 : memref<1x!tpu.dma_semaphore, #tpu.memory_space<semaphore_mem>> -> memref<!tpu.dma_semaphore, #tpu.memory_space<semaphore_mem>>
      tpu.enqueue_dma source(%arg7 : memref<32x64xbf16, #tpu.memory_space<any>>) target(%arg14 : memref<32x64xbf16, #tpu.memory_space<vmem>>) target_semaphore(%66 : memref<!tpu.dma_semaphore, #tpu.memory_space<semaphore_mem>>)
      %c2_i32 = arith.constant 2 : i32
      %67 = tpu.memref_slice %arg16[%c2_i32] : memref<3x!tpu.dma_semaphore, #tpu.memory_space<semaphore_mem>> -> memref<1x!tpu.dma_semaphore, #tpu.memory_space<semaphore_mem>>
      %68 = tpu.memref_squeeze %67 : memref<1x!tpu.dma_semaphore, #tpu.memory_space<semaphore_mem>> -> memref<!tpu.dma_semaphore, #tpu.memory_space<semaphore_mem>>
      tpu.enqueue_dma source(%arg8 : memref<32x32xbf16, #tpu.memory_space<any>>) target(%arg15 : memref<32x32xbf16, #tpu.memory_space<vmem>>) target_semaphore(%68 : memref<!tpu.dma_semaphore, #tpu.memory_space<semaphore_mem>>)
      %c0_25 = arith.constant 0 : index
      %c0_26 = arith.constant 0 : index
      %c0_27 = arith.constant 0 : index
      %69 = vector.load %arg2[%c0_25, %c0_26, %c0_27] : memref<1x8x32xf32, #tpu.memory_space<vmem>>, vector<1x8x32xf32>
      %70 = vector.shape_cast %69 : vector<1x8x32xf32> to vector<8x32xf32>
      %cst_28 = arith.constant dense<0.000000e+00> : vector<8xf32>
      %71 = vector.multi_reduction <add>, %70, %cst_28 [1] : vector<8x32xf32> to vector<8xf32>
      %72 = vector.shape_cast %71 : vector<8xf32> to vector<8x1xf32>
      %cst_29 = arith.constant 3.200000e+01 : f32
      %73 = vector.broadcast %cst_29 : f32 to vector<8x1xf32>
      %74 = arith.divf %72, %73 : vector<8x1xf32>
      %75 = vector.broadcast %74 : vector<8x1xf32> to vector<8x32xf32>
      %76 = arith.subf %70, %75 : vector<8x32xf32>
      %77 = arith.mulf %76, %76 : vector<8x32xf32>
      %cst_30 = arith.constant dense<0.000000e+00> : vector<8xf32>
      %78 = vector.multi_reduction <add>, %77, %cst_30 [1] : vector<8x32xf32> to vector<8xf32>
      %79 = vector.shape_cast %78 : vector<8xf32> to vector<8x1xf32>
      %cst_31 = arith.constant 3.200000e+01 : f32
      %80 = vector.broadcast %cst_31 : f32 to vector<8x1xf32>
      %81 = arith.divf %79, %80 : vector<8x1xf32>
      %82 = vector.broadcast %74 : vector<8x1xf32> to vector<8x32xf32>
      %83 = arith.subf %70, %82 : vector<8x32xf32>
      %cst_32 = arith.constant 9.99999974E-6 : f32
      %84 = vector.broadcast %cst_32 : f32 to vector<8x1xf32>
      %85 = arith.addf %81, %84 : vector<8x1xf32>
      %86 = math.rsqrt %85 : vector<8x1xf32>
      %87 = vector.broadcast %86 : vector<8x1xf32> to vector<8x32xf32>
      %88 = arith.mulf %83, %87 : vector<8x32xf32>
      %c0_33 = arith.constant 0 : index
      %c0_34 = arith.constant 0 : index
      %89 = vector.load %arg3[%c0_33, %c0_34] : memref<1x32xf32, #tpu.memory_space<vmem>>, vector<1x32xf32>
      %90 = vector.broadcast %89 : vector<1x32xf32> to vector<8x32xf32>
      %91 = arith.mulf %88, %90 : vector<8x32xf32>
      %c0_35 = arith.constant 0 : index
      %c0_36 = arith.constant 0 : index
      %92 = vector.load %arg4[%c0_35, %c0_36] : memref<1x32xf32, #tpu.memory_space<vmem>>, vector<1x32xf32>
      %93 = vector.broadcast %92 : vector<1x32xf32> to vector<8x32xf32>
      %94 = arith.addf %91, %93 : vector<8x32xf32>
      %95 = arith.truncf %94 : vector<8x32xf32> to vector<8x32xbf16>
      %c0_37 = arith.constant 0 : index
      %c0_38 = arith.constant 0 : index
      %96 = vector.load %arg10[%c0_37, %c0_38] : memref<8x32xbf16, #tpu.memory_space<vmem>>, vector<8x32xbf16>
      tpu.vector_store %arg10[%c0_37, %c0_38], %95 {strides = array<i32>} : memref<8x32xbf16, #tpu.memory_space<vmem>>, vector<8x32xbf16>,
      %c1_i32_39 = arith.constant 1 : i32
      %97 = tpu.memref_slice %arg16[%c1_i32_39] : memref<3x!tpu.dma_semaphore, #tpu.memory_space<semaphore_mem>> -> memref<1x!tpu.dma_semaphore, #tpu.memory_space<semaphore_mem>>
      %98 = tpu.memref_squeeze %97 : memref<1x!tpu.dma_semaphore, #tpu.memory_space<semaphore_mem>> -> memref<!tpu.dma_semaphore, #tpu.memory_space<semaphore_mem>>
      tpu.wait_dma2 semaphore(%98 : memref<!tpu.dma_semaphore, #tpu.memory_space<semaphore_mem>>) src(%arg7 : memref<32x64xbf16, #tpu.memory_space<any>>) dst(%arg14 : memref<32x64xbf16, #tpu.memory_space<vmem>>)
      %c0_40 = arith.constant 0 : index
      %c0_41 = arith.constant 0 : index
      %99 = vector.load %arg14[%c0_40, %c0_41] : memref<32x64xbf16, #tpu.memory_space<vmem>>, vector<32x64xbf16>
      %cst_42 = arith.constant dense<0.000000e+00> : vector<8x64xf32>
      %100 = tpu.matmul %95, %99, %cst_42 {dimension_numbers = #tpu.dot_dimension_numbers<[1], [0], [0], [1], [0, 0, 1, 1], [], []>} : vector<8x32xbf16>, vector<32x64xbf16>, vector<8x64xf32> -> vector<8x64xf32>
      %101 = arith.truncf %100 : vector<8x64xf32> to vector<8x64xbf16>
      %102 = vector.extract_strided_slice %101 {offsets = [0, 0], sizes = [8, 8], strides = [1, 1]} : vector<8x64xbf16> to vector<8x8xbf16>
      %c0_43 = arith.constant 0 : index
      %c0_44 = arith.constant 0 : index
      %c0_45 = arith.constant 0 : index
      %103 = vector.load %arg11[%c0_43, %c0_44, %c0_45] : memref<4x8x8xbf16, #tpu.memory_space<vmem>>, vector<1x8x8xbf16>
      %104 = vector.shape_cast %103 : vector<1x8x8xbf16> to vector<8x8xbf16>
      %105 = vector.shape_cast %102 : vector<8x8xbf16> to vector<1x8x8xbf16>
      tpu.vector_store %arg11[%c0_43, %c0_44, %c0_45], %105 {strides = array<i32>} : memref<4x8x8xbf16, #tpu.memory_space<vmem>>, vector<1x8x8xbf16>,
      %106 = vector.extract_strided_slice %101 {offsets = [0, 32], sizes = [8, 8], strides = [1, 1]} : vector<8x64xbf16> to vector<8x8xbf16>
      %c0_46 = arith.constant 0 : index
      %c0_47 = arith.constant 0 : index
      %c0_48 = arith.constant 0 : index
      %107 = vector.load %arg12[%c0_46, %c0_47, %c0_48] : memref<4x8x8xbf16, #tpu.memory_space<vmem>>, vector<1x8x8xbf16>
      %108 = vector.shape_cast %107 : vector<1x8x8xbf16> to vector<8x8xbf16>
      %109 = vector.shape_cast %106 : vector<8x8xbf16> to vector<1x8x8xbf16>
      tpu.vector_store %arg12[%c0_46, %c0_47, %c0_48], %109 {strides = array<i32>} : memref<4x8x8xbf16, #tpu.memory_space<vmem>>, vector<1x8x8xbf16>,
      %110 = vector.extract_strided_slice %101 {offsets = [0, 8], sizes = [8, 8], strides = [1, 1]} : vector<8x64xbf16> to vector<8x8xbf16>
      %c1 = arith.constant 1 : index
      %c0_49 = arith.constant 0 : index
      %c0_50 = arith.constant 0 : index
      %111 = vector.load %arg11[%c1, %c0_49, %c0_50] : memref<4x8x8xbf16, #tpu.memory_space<vmem>>, vector<1x8x8xbf16>
      %112 = vector.shape_cast %111 : vector<1x8x8xbf16> to vector<8x8xbf16>
      %113 = vector.shape_cast %110 : vector<8x8xbf16> to vector<1x8x8xbf16>
      tpu.vector_store %arg11[%c1, %c0_49, %c0_50], %113 {strides = array<i32>} : memref<4x8x8xbf16, #tpu.memory_space<vmem>>, vector<1x8x8xbf16>,
      %114 = vector.extract_strided_slice %101 {offsets = [0, 40], sizes = [8, 8], strides = [1, 1]} : vector<8x64xbf16> to vector<8x8xbf16>
      %c1_51 = arith.constant 1 : index
      %c0_52 = arith.constant 0 : index
      %c0_53 = arith.constant 0 : index
      %115 = vector.load %arg12[%c1_51, %c0_52, %c0_53] : memref<4x8x8xbf16, #tpu.memory_space<vmem>>, vector<1x8x8xbf16>
      %116 = vector.shape_cast %115 : vector<1x8x8xbf16> to vector<8x8xbf16>
      %117 = vector.shape_cast %114 : vector<8x8xbf16> to vector<1x8x8xbf16>
      tpu.vector_store %arg12[%c1_51, %c0_52, %c0_53], %117 {strides = array<i32>} : memref<4x8x8xbf16, #tpu.memory_space<vmem>>, vector<1x8x8xbf16>,
      %118 = vector.extract_strided_slice %101 {offsets = [0, 16], sizes = [8, 8], strides = [1, 1]} : vector<8x64xbf16> to vector<8x8xbf16>
      %c2 = arith.constant 2 : index
      %c0_54 = arith.constant 0 : index
      %c0_55 = arith.constant 0 : index
      %119 = vector.load %arg11[%c2, %c0_54, %c0_55] : memref<4x8x8xbf16, #tpu.memory_space<vmem>>, vector<1x8x8xbf16>
      %120 = vector.shape_cast %119 : vector<1x8x8xbf16> to vector<8x8xbf16>
      %121 = vector.shape_cast %118 : vector<8x8xbf16> to vector<1x8x8xbf16>
      tpu.vector_store %arg11[%c2, %c0_54, %c0_55], %121 {strides = array<i32>} : memref<4x8x8xbf16, #tpu.memory_space<vmem>>, vector<1x8x8xbf16>,
      %122 = vector.extract_strided_slice %101 {offsets = [0, 48], sizes = [8, 8], strides = [1, 1]} : vector<8x64xbf16> to vector<8x8xbf16>
      %c2_56 = arith.constant 2 : index
      %c0_57 = arith.constant 0 : index
      %c0_58 = arith.constant 0 : index
      %123 = vector.load %arg12[%c2_56, %c0_57, %c0_58] : memref<4x8x8xbf16, #tpu.memory_space<vmem>>, vector<1x8x8xbf16>
      %124 = vector.shape_cast %123 : vector<1x8x8xbf16> to vector<8x8xbf16>
      %125 = vector.shape_cast %122 : vector<8x8xbf16> to vector<1x8x8xbf16>
      tpu.vector_store %arg12[%c2_56, %c0_57, %c0_58], %125 {strides = array<i32>} : memref<4x8x8xbf16, #tpu.memory_space<vmem>>, vector<1x8x8xbf16>,
      %126 = vector.extract_strided_slice %101 {offsets = [0, 24], sizes = [8, 8], strides = [1, 1]} : vector<8x64xbf16> to vector<8x8xbf16>
      %c3 = arith.constant 3 : index
      %c0_59 = arith.constant 0 : index
      %c0_60 = arith.constant 0 : index
      %127 = vector.load %arg11[%c3, %c0_59, %c0_60] : memref<4x8x8xbf16, #tpu.memory_space<vmem>>, vector<1x8x8xbf16>
      %128 = vector.shape_cast %127 : vector<1x8x8xbf16> to vector<8x8xbf16>
      %129 = vector.shape_cast %126 : vector<8x8xbf16> to vector<1x8x8xbf16>
      tpu.vector_store %arg11[%c3, %c0_59, %c0_60], %129 {strides = array<i32>} : memref<4x8x8xbf16, #tpu.memory_space<vmem>>, vector<1x8x8xbf16>,
      %130 = vector.extract_strided_slice %101 {offsets = [0, 56], sizes = [8, 8], strides = [1, 1]} : vector<8x64xbf16> to vector<8x8xbf16>
      %c3_61 = arith.constant 3 : index
      %c0_62 = arith.constant 0 : index
      %c0_63 = arith.constant 0 : index
      %131 = vector.load %arg12[%c3_61, %c0_62, %c0_63] : memref<4x8x8xbf16, #tpu.memory_space<vmem>>, vector<1x8x8xbf16>
      %132 = vector.shape_cast %131 : vector<1x8x8xbf16> to vector<8x8xbf16>
      %133 = vector.shape_cast %130 : vector<8x8xbf16> to vector<1x8x8xbf16>
      tpu.vector_store %arg12[%c3_61, %c0_62, %c0_63], %133 {strides = array<i32>} : memref<4x8x8xbf16, #tpu.memory_space<vmem>>, vector<1x8x8xbf16>,
      %c0_i32_64 = arith.constant 0 : i32
      %134 = tpu.memref_slice %arg16[%c0_i32_64] : memref<3x!tpu.dma_semaphore, #tpu.memory_space<semaphore_mem>> -> memref<1x!tpu.dma_semaphore, #tpu.memory_space<semaphore_mem>>
      %135 = tpu.memref_squeeze %134 : memref<1x!tpu.dma_semaphore, #tpu.memory_space<semaphore_mem>> -> memref<!tpu.dma_semaphore, #tpu.memory_space<semaphore_mem>>
      tpu.wait_dma2 semaphore(%135 : memref<!tpu.dma_semaphore, #tpu.memory_space<semaphore_mem>>) src(%arg6 : memref<32x32xbf16, #tpu.memory_space<any>>) dst(%arg13 : memref<32x32xbf16, #tpu.memory_space<vmem>>)
      %c2_i32_65 = arith.constant 2 : i32
      %136 = tpu.memref_slice %arg16[%c2_i32_65] : memref<3x!tpu.dma_semaphore, #tpu.memory_space<semaphore_mem>> -> memref<1x!tpu.dma_semaphore, #tpu.memory_space<semaphore_mem>>
      %137 = tpu.memref_squeeze %136 : memref<1x!tpu.dma_semaphore, #tpu.memory_space<semaphore_mem>> -> memref<!tpu.dma_semaphore, #tpu.memory_space<semaphore_mem>>
      tpu.wait_dma2 semaphore(%137 : memref<!tpu.dma_semaphore, #tpu.memory_space<semaphore_mem>>) src(%arg8 : memref<32x32xbf16, #tpu.memory_space<any>>) dst(%arg15 : memref<32x32xbf16, #tpu.memory_space<vmem>>)
    } else {
    }
    %c8_i32 = arith.constant 8 : i32
    %3 = arith.muli %arg1, %c8_i32 : i32
    %4 = tpu.assume_multiple %3, 8 : i32
    %5 = arith.index_cast %4 : i32 to index
    %c0 = arith.constant 0 : index
    %6 = vector.load %arg10[%5, %c0] : memref<8x32xbf16, #tpu.memory_space<vmem>>, vector<8x32xbf16>
    %c0_1 = arith.constant 0 : index
    %c0_2 = arith.constant 0 : index
    %7 = vector.load %arg13[%c0_1, %c0_2] : memref<32x32xbf16, #tpu.memory_space<vmem>>, vector<32x32xbf16>
    %cst = arith.constant dense<0.000000e+00> : vector<8x32xf32>
    %8 = tpu.matmul %6, %7, %cst {dimension_numbers = #tpu.dot_dimension_numbers<[1], [0], [0], [1], [0, 0, 1, 1], [], []>} : vector<8x32xbf16>, vector<32x32xbf16>, vector<8x32xf32> -> vector<8x32xf32>
    %9 = arith.truncf %8 : vector<8x32xf32> to vector<8x32xbf16>
    %10 = vector.extract_strided_slice %9 {offsets = [0, 0], sizes = [8, 8], strides = [1, 1]} : vector<8x32xbf16> to vector<8x8xbf16>
    %11 = vector.extract_strided_slice %9 {offsets = [0, 8], sizes = [8, 8], strides = [1, 1]} : vector<8x32xbf16> to vector<8x8xbf16>
    %12 = vector.extract_strided_slice %9 {offsets = [0, 16], sizes = [8, 8], strides = [1, 1]} : vector<8x32xbf16> to vector<8x8xbf16>
    %13 = vector.extract_strided_slice %9 {offsets = [0, 24], sizes = [8, 8], strides = [1, 1]} : vector<8x32xbf16> to vector<8x8xbf16>
    %14 = vector.shape_cast %10 : vector<8x8xbf16> to vector<1x8x8xbf16>
    %15 = vector.shape_cast %11 : vector<8x8xbf16> to vector<1x8x8xbf16>
    %16 = vector.shape_cast %12 : vector<8x8xbf16> to vector<1x8x8xbf16>
    %17 = vector.shape_cast %13 : vector<8x8xbf16> to vector<1x8x8xbf16>
    %18 = tpu.concatenate %14, %15, %16, %17 in 0 : vector<1x8x8xbf16>, vector<1x8x8xbf16>, vector<1x8x8xbf16>, vector<1x8x8xbf16> -> vector<4x8x8xbf16>
    %cst_3 = arith.constant 0xFF800000 : f32
    %19 = vector.broadcast %cst_3 : f32 to vector<4x8x1xf32>
    %cst_4 = arith.constant 0.000000e+00 : f32
    %20 = vector.broadcast %cst_4 : f32 to vector<4x8x1xf32>
    %cst_5 = arith.constant 0.000000e+00 : f32
    %21 = vector.broadcast %cst_5 : f32 to vector<4x8x8xf32>
    %c0_6 = arith.constant 0 : index
    %c0_7 = arith.constant 0 : index
    %c0_8 = arith.constant 0 : index
    %22 = vector.load %arg11[%c0_6, %c0_7, %c0_8] : memref<4x8x8xbf16, #tpu.memory_space<vmem>>, vector<4x8x8xbf16>
    %c0_9 = arith.constant 0 : index
    %c0_10 = arith.constant 0 : index
    %c0_11 = arith.constant 0 : index
    %23 = vector.load %arg12[%c0_9, %c0_10, %c0_11] : memref<4x8x8xbf16, #tpu.memory_space<vmem>>, vector<4x8x8xbf16>
    "tpu.trace_start"() <{level = 10 : i32, message = "hqd,hkd->hqk"}> : () -> ()
    %cst_12 = arith.constant dense<0.000000e+00> : vector<4x8x8xf32>
    %24 = tpu.matmul %18, %22, %cst_12 {dimension_numbers = #tpu.dot_dimension_numbers<[2], [2], [1], [1], [0, 0, 0, 1, 1, 1], [0], [0]>} : vector<4x8x8xbf16>, vector<4x8x8xbf16>, vector<4x8x8xf32> -> vector<4x8x8xf32>
    "tpu.trace_stop"() : () -> ()
    %cst_13 = arith.constant dense<0xFF800000> : vector<4x8xf32>
    %25 = vector.multi_reduction <maximumf>, %24, %cst_13 [2] : vector<4x8x8xf32> to vector<4x8xf32>
    %26 = vector.shape_cast %25 : vector<4x8xf32> to vector<4x8x1xf32>
    %27 = arith.maximumf %19, %26 : vector<4x8x1xf32>
    %28 = arith.subf %19, %27 : vector<4x8x1xf32>
    %29 = math.exp %28 : vector<4x8x1xf32>
    %30 = vector.broadcast %27 : vector<4x8x1xf32> to vector<4x8x8xf32>
    %31 = arith.subf %24, %30 : vector<4x8x8xf32>
    %32 = math.exp %31 : vector<4x8x8xf32>
    %33 = arith.mulf %29, %20 : vector<4x8x1xf32>
    %cst_14 = arith.constant dense<0.000000e+00> : vector<4x8xf32>
    %34 = vector.multi_reduction <add>, %32, %cst_14 [2] : vector<4x8x8xf32> to vector<4x8xf32>
    %35 = vector.shape_cast %34 : vector<4x8xf32> to vector<4x8x1xf32>
    %36 = arith.addf %33, %35 : vector<4x8x1xf32>
    %37 = vector.broadcast %29 : vector<4x8x1xf32> to vector<4x8x8xf32>
    %38 = arith.mulf %37, %21 : vector<4x8x8xf32>
    %39 = arith.truncf %32 : vector<4x8x8xf32> to vector<4x8x8xbf16>
    "tpu.trace_start"() <{level = 10 : i32, message = "hqk,hkd->hqd"}> : () -> ()
    %cst_15 = arith.constant dense<0.000000e+00> : vector<4x8x8xf32>
    %40 = tpu.matmul %39, %23, %cst_15 {dimension_numbers = #tpu.dot_dimension_numbers<[2], [1], [1], [2], [0, 0, 0, 1, 1, 2], [0], [0]>} : vector<4x8x8xbf16>, vector<4x8x8xbf16>, vector<4x8x8xf32> -> vector<4x8x8xf32>
    "tpu.trace_stop"() : () -> ()
    %41 = arith.addf %38, %40 : vector<4x8x8xf32>
    %42 = tpu.reciprocal %36 {approx = true} : vector<4x8x1xf32> -> vector<4x8x1xf32>
    %43 = vector.broadcast %42 : vector<4x8x1xf32> to vector<4x8x8xf32>
    %44 = arith.mulf %41, %43 : vector<4x8x8xf32>
    %45 = arith.truncf %44 : vector<4x8x8xf32> to vector<4x8x8xbf16>
    %46 = vector.extract_strided_slice %45 {offsets = [0, 0, 0], sizes = [1, 8, 8], strides = [1, 1, 1]} : vector<4x8x8xbf16> to vector<1x8x8xbf16>
    %47 = vector.shape_cast %46 : vector<1x8x8xbf16> to vector<8x8xbf16>
    %48 = vector.extract_strided_slice %45 {offsets = [1, 0, 0], sizes = [1, 8, 8], strides = [1, 1, 1]} : vector<4x8x8xbf16> to vector<1x8x8xbf16>
    %49 = vector.shape_cast %48 : vector<1x8x8xbf16> to vector<8x8xbf16>
    %50 = vector.extract_strided_slice %45 {offsets = [2, 0, 0], sizes = [1, 8, 8], strides = [1, 1, 1]} : vector<4x8x8xbf16> to vector<1x8x8xbf16>
    %51 = vector.shape_cast %50 : vector<1x8x8xbf16> to vector<8x8xbf16>
    %52 = vector.extract_strided_slice %45 {offsets = [3, 0, 0], sizes = [1, 8, 8], strides = [1, 1, 1]} : vector<4x8x8xbf16> to vector<1x8x8xbf16>
    %53 = vector.shape_cast %52 : vector<1x8x8xbf16> to vector<8x8xbf16>
    %54 = tpu.concatenate %47, %49, %51, %53 in 1 : vector<8x8xbf16>, vector<8x8xbf16>, vector<8x8xbf16>, vector<8x8xbf16> -> vector<8x32xbf16>
    %c0_16 = arith.constant 0 : index
    %c0_17 = arith.constant 0 : index
    %55 = vector.load %arg15[%c0_16, %c0_17] : memref<32x32xbf16, #tpu.memory_space<vmem>>, vector<32x32xbf16>
    %cst_18 = arith.constant dense<0.000000e+00> : vector<8x32xf32>
    %56 = tpu.matmul %54, %55, %cst_18 {dimension_numbers = #tpu.dot_dimension_numbers<[1], [0], [0], [1], [0, 0, 1, 1], [], []>} : vector<8x32xbf16>, vector<32x32xbf16>, vector<8x32xf32> -> vector<8x32xf32>
    %c0_19 = arith.constant 0 : index
    %c0_20 = arith.constant 0 : index
    %57 = vector.load %arg5[%c0_19, %c0_20] : memref<1x32xf32, #tpu.memory_space<vmem>>, vector<1x32xf32>
    %58 = vector.broadcast %57 : vector<1x32xf32> to vector<8x32xf32>
    %59 = arith.addf %56, %58 : vector<8x32xf32>
    %c0_21 = arith.constant 0 : index
    %c0_22 = arith.constant 0 : index
    %c0_23 = arith.constant 0 : index
    %60 = vector.load %arg9[%c0_21, %c0_22, %c0_23] : memref<1x8x32xf32, #tpu.memory_space<vmem>>, vector<1x8x32xf32>
    %61 = vector.shape_cast %60 : vector<1x8x32xf32> to vector<8x32xf32>
    %62 = vector.shape_cast %59 : vector<8x32xf32> to vector<1x8x32xf32>
    tpu.vector_store %arg9[%c0_21, %c0_22, %c0_23], %62 {strides = array<i32>} : memref<1x8x32xf32, #tpu.memory_space<vmem>>, vector<1x8x32xf32>,
    return
  }
  func.func @transform_0(%arg0: i32, %arg1: i32) -> (i32, i32, i32) {
    %c0_i32 = arith.constant 0 : i32
    %c0_i32_0 = arith.constant 0 : i32
    %c0_i32_1 = arith.constant 0 : i32
    return %arg0, %c0_i32, %c0_i32_0 : i32, i32, i32
  }
  func.func @transform_1(%arg0: i32, %arg1: i32) -> (i32, i32) {
    %c0_i32 = arith.constant 0 : i32
    %c0_i32_0 = arith.constant 0 : i32
    %c0_i32_1 = arith.constant 0 : i32
    return %c0_i32, %c0_i32_0 : i32, i32
  }
  func.func @transform_2(%arg0: i32, %arg1: i32) -> (i32, i32) {
    %c0_i32 = arith.constant 0 : i32
    %c0_i32_0 = arith.constant 0 : i32
    %c0_i32_1 = arith.constant 0 : i32
    return %c0_i32, %c0_i32_0 : i32, i32
  }
  func.func @transform_3(%arg0: i32, %arg1: i32) -> (i32, i32) {
    %c0_i32 = arith.constant 0 : i32
    %c0_i32_0 = arith.constant 0 : i32
    %c0_i32_1 = arith.constant 0 : i32
    return %c0_i32, %c0_i32_0 : i32, i32
  }
  func.func @transform_7(%arg0: i32, %arg1: i32) -> (i32, i32, i32) {
    %c0_i32 = arith.constant 0 : i32
    %c0_i32_0 = arith.constant 0 : i32
    return %arg0, %arg1, %c0_i32 : i32, i32, i32
  }
}

</mosaic_0001>

<llo_original>
// kernel: tpu_custom_call.1
$region0: #{tpu_custom_call.1}
  #allocation0 [shape = 'u32[]', space=smem, size = 0x4, offset = 0x4, fixed_abs, tag = 'smem constant byte address 0x4 - core index']
  #allocation1 [shape = 'u32[144,128]{1,0:T(1,128)}', space=vmem, size = 0x12000, scoped, tag = 'internal scratch']
  #allocation2 [shape = 'bf16[8,32]{1,0:T(8,128)(2,1)}', space=vmem, size = 0x800, scoped, tag = 'scratch operand']
  #allocation3 [shape = 'bf16[4,8,8]{2,1,0:T(8,128)(2,1)}', space=vmem, size = 0x2000, scoped, tag = 'scratch operand']
  #allocation4 [shape = 'bf16[4,8,8]{2,1,0:T(8,128)(2,1)}', space=vmem, size = 0x2000, scoped, tag = 'scratch operand']
  #allocation5 [shape = 'bf16[32,32]{1,0:T(16,128)(2,1)}', space=vmem, size = 0x2000, scoped, tag = 'scratch operand']
  #allocation6 [shape = 'bf16[32,64]{1,0:T(16,128)(2,1)}', space=vmem, size = 0x2000, scoped, tag = 'scratch operand']
  #allocation7 [shape = 'bf16[32,32]{1,0:T(16,128)(2,1)}', space=vmem, size = 0x2000, scoped, tag = 'scratch operand']
  #allocation8 [shape = 's32[3]{0}', space=sflag, size = 0xc, scoped, tag = 'scratch operand']
  #allocation18 [shape = 's32[]', space=sflag, size = 0x4, offset = 0, fixed_abs, tag = 'sflag constant byte address 0x0 - dummy sync flag']
  #allocation19 [shape = 's32[]', space=sflag, size = 0x4, offset = 0, fixed_abs, tag = 'sflag constant byte address 0x0 - dummy sync flag']
  #allocation20 [shape = 'u32[]', space=smem, size = 0x4, offset = 0x44, fixed_abs, tag = 'smem constant byte address 0x44 - assertion arg 0']
  #allocation21 [shape = 'u32[]', space=smem, size = 0x4, offset = 0x48, fixed_abs, tag = 'smem constant byte address 0x48 - assertion arg 1']
  #allocation22 [shape = 's32[]', space=sflag, size = 0x4, offset = 0, fixed_abs, tag = 'sflag constant byte address 0x0 - dummy sync flag']
  #allocation23 [shape = 's32[]', space=sflag, size = 0x4, offset = 0, fixed_abs, tag = 'sflag constant byte address 0x0 - dummy sync flag']
  #allocation24 [shape = 's32[]', space=sflag, size = 0x4, offset = 0, fixed_abs, tag = 'sflag constant byte address 0x0 - dummy sync flag']
  #allocation25 [shape = 's32[]', space=sflag, size = 0x4, offset = 0, fixed_abs, tag = 'sflag constant byte address 0x0 - dummy sync flag']
  %s0 = inlined_call_operand.hbm [shape: f32[2,8,32], index: 0, kind: input, shape index: {}]
  %s1 = inlined_call_operand.hbm [shape: f32[1,32], index: 1, kind: input, shape index: {}]
  %s2 = inlined_call_operand.hbm [shape: f32[1,32], index: 2, kind: input, shape index: {}]
  %s3 = inlined_call_operand.hbm [shape: f32[1,32], index: 3, kind: input, shape index: {}]
  %s4 = inlined_call_operand.hbm [shape: bf16[32,32], index: 4, kind: input, shape index: {}]
  %s5 = inlined_call_operand.hbm [shape: bf16[32,64], index: 5, kind: input, shape index: {}]
  %s6 = inlined_call_operand.hbm [shape: bf16[32,32], index: 6, kind: input, shape index: {}]
  %s7 = inlined_call_operand.hbm [shape: f32[2,8,32], index: 7, kind: output, shape index: {}]
  %s8 = sld [smem:[#allocation0]]
  $region81: #{tpu_custom_call.1} parent=0
    _
  %s10 = ssub.s32 1, %s8
  %s11 = scalar_select 0, %s10, %s8
  $region1: #{tpu_custom_call.1} parent=0
    #allocation9 [shape = 'u8[8192]{0}', space=vmem, size = 0x2000, scoped, tag = 'input window, operand 0']
    #allocation10 [shape = 's32[2]{0}', space=sflag, size = 0x8, scoped, tag = 'scoped memory for tpu_custom_call.1']
    #allocation11 [shape = 's32[2]{0}', space=sflag, size = 0x8, scoped, tag = 'scoped memory for tpu_custom_call.1']
    #allocation12 [shape = 'u8[512]{0}', space=vmem, size = 0x400, scoped, tag = 'input window, operand 1, single buffered']
    #allocation13 [shape = 's32[1]{0}', space=sflag, size = 0x4, scoped, tag = 'scoped memory for tpu_custom_call.1']
    #allocation14 [shape = 'u8[512]{0}', space=vmem, size = 0x400, scoped, tag = 'input window, operand 2, single buffered']
    #allocation15 [shape = 'u8[512]{0}', space=vmem, size = 0x400, scoped, tag = 'input window, operand 3, single buffered']
    #allocation16 [shape = 's32[1]{0}', space=sflag, size = 0x4, scoped, tag = 'scoped memory for tpu_custom_call.1']
    #allocation17 [shape = 'u8[8192]{0}', space=vmem, size = 0x2000, scoped, tag = 'output window, operand 0']
    %12 = vsyncpa [#allocation10], 0
    %s13 = scalar_lea.sflag [#allocation10], 1
    %14 = vsyncpa %s13, 0
    %15 = vsyncpa [#allocation13], 0
    %16 = vsyncpa [#allocation16], 0
    %17 = vsyncpa [#allocation11], 0
    %s18 = scalar_lea.sflag [#allocation11], 1
    %19 = vsyncpa %s18, 0
    loop: start=0, step=1, limit=4
    $region2: #{tpu_custom_call.1} parent=1 // loop_pre_header
      _
    $region3: #{tpu_custom_call.1} parent=1 // loop_header
      %s21 = sphi 0, %s25
      %p22 = scmp.ge.s32.totalorder %s21, 4
      %s28 = sphi 0, %s40
      %s29 = sphi 0, %s36
      %s30 = sphi 0, %s28
      %s31 = sphi 0, %s29
      %s32 = sphi 0, %s30
      %s33 = sphi 0, %s31
      %s43 = sphi 0, %s45
      %s46 = sphi 0, %s43
      %s47 = sphi 0, %s46
      %s63 = sphi 0, %s47
      %s67 = sphi 0, %s67
      %s69 = sphi 0, %s67
      %s70 = sphi 0, %s69
      %s84 = sphi 0, %s70
      %s88 = sphi 0, %s88
      %s90 = sphi 0, %s88
      %s91 = sphi 0, %s90
      %s105 = sphi 0, %s91
      %s109 = sphi 0, %s109
      %s111 = sphi 0, %s109
      %s112 = sphi 0, %s111
      %s126 = sphi 0, %s112
      %s134 = sphi 0, %s136
      %s137 = sphi 0, %s134
      %s138 = sphi 0, %s137
      %s154 = sphi 0, %s138
    $region4: #{tpu_custom_call.1} parent=1 // loop_header_branch
      %24 = sbr.rel (%p22) target = $region8
    $region5: #{tpu_custom_call.1} parent=1 // loop_body
      %s26 = ssub.s32 %s21, 1
      %s27 = ssub.s32 %s21, 2
      %s34 = sadd.s32 1, %s29
      %p35 = scmp.ge.s32.totalorder %s34, 1
      %s36 = scalar_select %p35, 0, %s34
      %s37 = sadd.s32 1, %s28
      %s38 = scalar_select %p35, %s37, %s28
      %p39 = scmp.ge.s32.totalorder %s38, 2
      %s40 = scalar_select %p39, 0, %s38
      %s41 = ssub.s32 %s28, %s40
      %p42 = scmp.eq.s32.totalorder %s41, 0
      %s44 = sadd.s32 %s43, 1
      %s45 = scalar_select %p42, %s43, %s44
      %p48 = pneg %p42
      %p49 = scmp.eq.s32.totalorder %s21, 1
      %p50 = por %p48, %p49
      %p51 = scmp.ne.s32.totalorder %s43, %s46
      %p52 = scmp.eq.s32.totalorder %s21, 0
      %p53 = por %p51, %p52
      %p54 = scmp.ne.s32.totalorder %s43, %s46
      %p55 = scmp.eq.s32.totalorder %s26, 1
      %p56 = por %p54, %p55
      %p57 = scmp.ne.s32.totalorder %s46, %s47
      %p58 = scmp.eq.s32.totalorder %s26, 0
      %p59 = por %p57, %p58
      %p60 = scmp.ne.s32.totalorder %s46, %s47
      %p61 = scmp.eq.s32.totalorder %s27, 1
      %p62 = por %p60, %p61
      %p64 = scmp.ne.s32.totalorder %s47, %s63
      %p65 = scmp.eq.s32.totalorder %s27, 0
      %p66 = por %p64, %p65
      %s68 = sadd.s32 %s67, 1
      %p71 = scmp.eq.s32.totalorder %s21, 1
      %p72 = scmp.ne.s32.totalorder %s67, %s69
      %p73 = scmp.eq.s32.totalorder %s21, 0
      %p74 = por %p72, %p73
      %p75 = scmp.ne.s32.totalorder %s67, %s69
      %p76 = scmp.eq.s32.totalorder %s26, 1
      %p77 = por %p75, %p76
      %p78 = scmp.ne.s32.totalorder %s69, %s70
      %p79 = scmp.eq.s32.totalorder %s26, 0
      %p80 = por %p78, %p79
      %p81 = scmp.ne.s32.totalorder %s69, %s70
      %p82 = scmp.eq.s32.totalorder %s27, 1
      %p83 = por %p81, %p82
      %p85 = scmp.ne.s32.totalorder %s70, %s84
      %p86 = scmp.eq.s32.totalorder %s27, 0
      %p87 = por %p85, %p86
      %s89 = sadd.s32 %s88, 1
      %p92 = scmp.eq.s32.totalorder %s21, 1
      %p93 = scmp.ne.s32.totalorder %s88, %s90
      %p94 = scmp.eq.s32.totalorder %s21, 0
      %p95 = por %p93, %p94
      %p96 = scmp.ne.s32.totalorder %s88, %s90
      %p97 = scmp.eq.s32.totalorder %s26, 1
      %p98 = por %p96, %p97
      %p99 = scmp.ne.s32.totalorder %s90, %s91
      %p100 = scmp.eq.s32.totalorder %s26, 0
      %p101 = por %p99, %p100
      %p102 = scmp.ne.s32.totalorder %s90, %s91
      %p103 = scmp.eq.s32.totalorder %s27, 1
      %p104 = por %p102, %p103
      %p106 = scmp.ne.s32.totalorder %s91, %s105
      %p107 = scmp.eq.s32.totalorder %s27, 0
      %p108 = por %p106, %p107
      %s110 = sadd.s32 %s109, 1
      %p113 = scmp.eq.s32.totalorder %s21, 1
      %p114 = scmp.ne.s32.totalorder %s109, %s111
      %p115 = scmp.eq.s32.totalorder %s21, 0
      %p116 = por %p114, %p115
      %p117 = scmp.ne.s32.totalorder %s109, %s111
      %p118 = scmp.eq.s32.totalorder %s26, 1
      %p119 = por %p117, %p118
      %p120 = scmp.ne.s32.totalorder %s111, %s112
      %p121 = scmp.eq.s32.totalorder %s26, 0
      %p122 = por %p120, %p121
      %p123 = scmp.ne.s32.totalorder %s111, %s112
      %p124 = scmp.eq.s32.totalorder %s27, 1
      %p125 = por %p123, %p124
      %p127 = scmp.ne.s32.totalorder %s112, %s126
      %p128 = scmp.eq.s32.totalorder %s27, 0
      %p129 = por %p127, %p128
      %s130 = ssub.s32 %s28, %s40
      %s131 = ssub.s32 %s29, %s36
      %s132 = sor.u32 %s130, %s131
      %p133 = scmp.eq.s32.totalorder %s132, 0
      %s135 = sadd.s32 %s134, 1
      %s136 = scalar_select %p133, %s134, %s135
      %p139 = pneg %p133
      %p140 = scmp.eq.s32.totalorder %s21, 1
      %p141 = por %p139, %p140
      %p142 = scmp.ne.s32.totalorder %s134, %s137
      %p143 = scmp.eq.s32.totalorder %s21, 0
      %p144 = por %p142, %p143
      %p145 = scmp.ne.s32.totalorder %s134, %s137
      %p146 = scmp.eq.s32.totalorder %s26, 1
      %p147 = por %p145, %p146
      %p148 = scmp.ne.s32.totalorder %s137, %s138
      %p149 = scmp.eq.s32.totalorder %s26, 0
      %p150 = por %p148, %p149
      %p151 = scmp.ne.s32.totalorder %s137, %s138
      %p152 = scmp.eq.s32.totalorder %s27, 1
      %p153 = por %p151, %p152
      %p155 = scmp.ne.s32.totalorder %s138, %s154
      %p156 = scmp.eq.s32.totalorder %s27, 0
      %p157 = por %p155, %p156
      %p158 = scmp.le.s32.totalorder 1, %s21
      %p159 = scmp.lt.s32.totalorder %s21, 3
      %p160 = pnand %p158, %p159
      %p161 = pneg %p160
      // Predicated region
      $region9: #{tpu_custom_call.1} parent=5 // pred_check
        _
      $region10: #{tpu_custom_call.1} parent=5 // pred_check_branch
        %163 = sbr.rel (%p160) target = $region12
      $region11: #{tpu_custom_call.1} parent=5 // pred_region
        %s164 = ssub.s32 %s21, 1
        // Predicated region
        $region13: #{tpu_custom_call.1} parent=11 // pred_check
          %p165 = pneg %p80
        $region14: #{tpu_custom_call.1} parent=11 // pred_check_branch
          %167 = sbr.rel (%p165) target = $region16
        $region15: #{tpu_custom_call.1} parent=11 // pred_region
          %s169 = ssub.s32 16, 16
          %170 = vsyncadd [#allocation13], %s169
          %s172 = sshll.u32 [#allocation12], 4
          %s173 = int_to_ptr.vmem [resolvable:$true] %s172
          %175 = dma.hbm_to_vmem [thread:$0]  %s1, 16, %s173, [#allocation13]
        $region16: #{tpu_custom_call.1} parent=11 // pred_fallthru
          _
        // Predicated region
        $region17: #{tpu_custom_call.1} parent=11 // pred_check
          %p176 = pneg %p101
        $region18: #{tpu_custom_call.1} parent=11 // pred_check_branch
          %178 = sbr.rel (%p176) target = $region20
        $region19: #{tpu_custom_call.1} parent=11 // pred_region
          %s180 = ssub.s32 16, 16
          %181 = vsyncadd [#allocation13], %s180
          %s183 = sshll.u32 [#allocation14], 4
          %s184 = int_to_ptr.vmem [resolvable:$true] %s183
          %186 = dma.hbm_to_vmem [thread:$0]  %s2, 16, %s184, [#allocation13]
        $region20: #{tpu_custom_call.1} parent=11 // pred_fallthru
          _
        // Predicated region
        $region21: #{tpu_custom_call.1} parent=11 // pred_check
          %p187 = pneg %p122
        $region22: #{tpu_custom_call.1} parent=11 // pred_check_branch
          %189 = sbr.rel (%p187) target = $region24
        $region23: #{tpu_custom_call.1} parent=11 // pred_region
          %s191 = ssub.s32 16, 16
          %192 = vsyncadd [#allocation16], %s191
          %s194 = sshll.u32 [#allocation15], 4
          %s195 = int_to_ptr.vmem [resolvable:$true] %s194
          %197 = dma.hbm_to_vmem [thread:$0]  %s3, 16, %s195, [#allocation16]
        $region24: #{tpu_custom_call.1} parent=11 // pred_fallthru
          _
      $region12: #{tpu_custom_call.1} parent=5 // pred_fallthru
        _
      %p198 = scmp.lt.s32.totalorder %s21, 2
      // Predicated region
      $region25: #{tpu_custom_call.1} parent=5 // pred_check
        %p199 = pneg %p198
      $region26: #{tpu_custom_call.1} parent=5 // pred_check_branch
        %201 = sbr.rel (%p199) target = $region28
      $region27: #{tpu_custom_call.1} parent=5 // pred_region
        // Predicated region
        $region29: #{tpu_custom_call.1} parent=27 // pred_check
          %p202 = pneg %p53
        $region30: #{tpu_custom_call.1} parent=27 // pred_check_branch
          %204 = sbr.rel (%p202) target = $region32
        $region31: #{tpu_custom_call.1} parent=27 // pred_region
          %s205 = sand.u32 %s43, 1
          %s206 = scalar_lea.sflag [#allocation10], %s205
          %s207 = sand.u32 %s43, 1
          %s208 = smul.addr %s207, 8
          %s209 = scalar_lea.vmem [#allocation9], %s208
          %s211 = ssub.s32 128, 128
          %212 = vsyncadd %s206, %s211
          %s213 = smul.addr %s28, 128
          %s214 = scalar_lea.hbm %s0, %s213
          %s216 = sshll.u32 %s209, 4
          %s217 = int_to_ptr.vmem [resolvable:$true] %s216
          %219 = dma.hbm_to_vmem [thread:$0]  %s214, 128, %s217, %s206
        $region32: #{tpu_custom_call.1} parent=27 // pred_fallthru
          _
      $region28: #{tpu_custom_call.1} parent=5 // pred_fallthru
        _
      %p220 = scmp.le.s32.totalorder 1, %s21
      %p221 = scmp.lt.s32.totalorder %s21, 3
      %p222 = pnand %p220, %p221
      %p223 = pneg %p222
      // Predicated region
      $region33: #{tpu_custom_call.1} parent=5 // pred_check
        _
      $region34: #{tpu_custom_call.1} parent=5 // pred_check_branch
        %225 = sbr.rel (%p222) target = $region36
      $region35: #{tpu_custom_call.1} parent=5 // pred_region
        %s226 = ssub.s32 %s21, 1
        %s227 = sand.u32 %s46, 1
        %s228 = scalar_lea.sflag [#allocation10], %s227
        %s229 = sand.u32 %s46, 1
        %s230 = smul.addr %s229, 8
        %s231 = scalar_lea.vmem [#allocation9], %s230
        // Predicated region
        $region37: #{tpu_custom_call.1} parent=35 // pred_check
          %p232 = pneg %p59
        $region38: #{tpu_custom_call.1} parent=35 // pred_check_branch
          %234 = sbr.rel (%p232) target = $region40
        $region39: #{tpu_custom_call.1} parent=35 // pred_region
          %235 = dma.done %s228, 128
        $region40: #{tpu_custom_call.1} parent=35 // pred_fallthru
          _
        // Predicated region
        $region41: #{tpu_custom_call.1} parent=35 // pred_check
          %p236 = pneg %p80
        $region42: #{tpu_custom_call.1} parent=35 // pred_check_branch
          %238 = sbr.rel (%p236) target = $region44
        $region43: #{tpu_custom_call.1} parent=35 // pred_region
          %239 = dma.done [#allocation13], 16
        $region44: #{tpu_custom_call.1} parent=35 // pred_fallthru
          _
        // Predicated region
        $region45: #{tpu_custom_call.1} parent=35 // pred_check
          %p240 = pneg %p101
        $region46: #{tpu_custom_call.1} parent=35 // pred_check_branch
          %242 = sbr.rel (%p240) target = $region48
        $region47: #{tpu_custom_call.1} parent=35 // pred_region
          %243 = dma.done [#allocation13], 16
        $region48: #{tpu_custom_call.1} parent=35 // pred_fallthru
          _
        // Predicated region
        $region49: #{tpu_custom_call.1} parent=35 // pred_check
          %p244 = pneg %p122
        $region50: #{tpu_custom_call.1} parent=35 // pred_check_branch
          %246 = sbr.rel (%p244) target = $region52
        $region51: #{tpu_custom_call.1} parent=35 // pred_region
          %247 = dma.done [#allocation16], 16
        $region52: #{tpu_custom_call.1} parent=35 // pred_fallthru
          _
        %s248 = sand.u32 %s46, 1
        %s249 = scalar_lea.sflag [#allocation10], %s248
        %s250 = sand.u32 %s46, 1
        %s251 = smul.addr %s250, 8
        %s252 = scalar_lea.vmem [#allocation9], %s251
        %p253 = pneg %p59
        %p254 = pneg %p56
        %p255 = pneg %p80
        %p256 = pneg %p77
        %p257 = pneg %p101
        %p258 = pneg %p98
        %p259 = pneg %p122
        %p260 = pneg %p119
        %p261 = pneg %p150
        %p262 = pneg %p147
        %s263 = sand.u32 %s137, 1
        %s264 = scalar_lea.sflag [#allocation11], %s263
        %s265 = sand.u32 %s137, 1
        %s266 = smul.addr %s265, 8
        %s267 = scalar_lea.vmem [#allocation17], %s266
        %p269 = scmp.eq.s32.totalorder %s31, 0
        // Predicated region
        $region53: #{tpu_custom_call.1} parent=35 // pred_check
          %p270 = pneg %p269
        $region54: #{tpu_custom_call.1} parent=35 // pred_check_branch
          %272 = sbr.rel (%p270) target = $region56
        $region55: #{tpu_custom_call.1} parent=35 // pred_region
          // Predicated region
          $region57: #{tpu_custom_call.1} parent=55 // pred_check
            _
          $region58: #{tpu_custom_call.1} parent=55 // pred_check_branch
            %274 = sbr.rel target = $region60
          $region59: #{tpu_custom_call.1} parent=55 // pred_region
            %275 = sst [smem:[#allocation20]] [#allocation19]
            %276 = sst [smem:[#allocation21]] [#allocation18]
          $region60: #{tpu_custom_call.1} parent=55 // pred_fallthru
            _
          %278 = shalt.err (0)
          %s280 = sshll.u32 [#allocation5], 4
          %s281 = int_to_ptr.vmem [resolvable:$true] %s280
          %283 = dma.hbm_to_vmem [thread:$0]  %s4, 256, %s281, [#allocation8]
          %s284 = scalar_lea.sflag [#allocation8], 1
          // Predicated region
          $region61: #{tpu_custom_call.1} parent=55 // pred_check
            _
          $region62: #{tpu_custom_call.1} parent=55 // pred_check_branch
            %286 = sbr.rel target = $region64
          $region63: #{tpu_custom_call.1} parent=55 // pred_region
            %287 = sst [smem:[#allocation20]] [#allocation23]
            %288 = sst [smem:[#allocation21]] [#allocation22]
          $region64: #{tpu_custom_call.1} parent=55 // pred_fallthru
            _
          %290 = shalt.err (0)
          %s292 = sshll.u32 [#allocation6], 4
          %s293 = int_to_ptr.vmem [resolvable:$true] %s292
          %295 = dma.hbm_to_vmem [thread:$0]  %s5, 256, %s293, %s284
          %s296 = scalar_lea.sflag [#allocation8], 2
          // Predicated region
          $region65: #{tpu_custom_call.1} parent=55 // pred_check
            _
          $region66: #{tpu_custom_call.1} parent=55 // pred_check_branch
            %298 = sbr.rel target = $region68
          $region67: #{tpu_custom_call.1} parent=55 // pred_region
            %299 = sst [smem:[#allocation20]] [#allocation25]
            %300 = sst [smem:[#allocation21]] [#allocation24]
          $region68: #{tpu_custom_call.1} parent=55 // pred_fallthru
            _
          %302 = shalt.err (0)
          %s304 = sshll.u32 [#allocation7], 4
          %s305 = int_to_ptr.vmem [resolvable:$true] %s304
          %307 = dma.hbm_to_vmem [thread:$0]  %s6, 256, %s305, %s296
          %v308 = vld [vmem:[%s231] sm:$0xff]
          %vm309 = vcmask 261120
          %v310 = vsel %vm309, %v308, 0.0
          %311 = vadd.xlane.f32.xlu0 %v310
          %v312 = vpop.xlane.xlu0 %311
          %v313 = vrcp.pop 32.0
          %v314 = vmul.f32 %v312, %v313
          %v315 = vsub.f32 %v308, %v314
          %v316 = vmul.f32 %v315, %v315
          %v317 = vsel %vm309, %v316, 0.0
          %318 = vadd.xlane.f32.xlu0 %v317
          %v319 = vpop.xlane.xlu0 %318
          %v320 = vmul.f32 %v319, %v313
          %v321 = vadd.f32 %v320, 1e-05
          %v322 = vrsqrt.pop %v321
          %v323 = vmul.f32 %v315, %v322
          %v324 = vld [vmem:[#allocation12] sm:$0x1]
          %v326 = vlaneseq
          %v327 = vshrl.u32 %v326, 7
          %v328 = vsub.s32 0, %v327
          %v329 = vrot.slane %v324, %v328
          %v331 = vmul.f32 %v323, %v329
          %v332 = vld [vmem:[#allocation14] sm:$0x1]
          %v334 = vlaneseq
          %v335 = vshrl.u32 %v334, 7
          %v336 = vsub.s32 0, %v335
          %v337 = vrot.slane %v332, %v336
          %v339 = vadd.f32 %v331, %v337
          %v340 = vpack.c.bf16 %v339, %v339
          %vm341 = vcmask 257024
          %342 = vst.msk [vmem:[#allocation2] sm:$0xf] %vm341, %v340
          %s343 = smul.u32 4, 4
          %s344 = smul.u32 %s343, 1
          %s345 = sshll.u32 %s344, 4
          %346 = dma.done %s284, %s345
          %v347 = vld [vmem:[#allocation6] sm:$0xff]
          %v348 = vld [vmem:[#allocation6 + $0x8] sm:$0xff]
          %v350 = vsel %vm309, %v340, 0
          %352 = vmatprep.subr.bf16.mxu0 0
          %353 = vmatpush1.bf16.msra.mxu0 %v347
          %354 = vmatprep.subr.bf16.mxu0 0
          %355 = vmatpush1.bf16.msra.mxu0 %v348
          %356 = vmatprep.subr.bf16.mxu0 0
          %357 = vmatpush1.bf16.msra.mxu0 0
          %358 = vmatprep.subr.bf16.mxu0 0
          %359 = vmatpush1.bf16.msra.mxu0 0
          %360 = vmatprep.subr.bf16.mxu0 0
          %361 = vmatpush1.bf16.msra.mxu0 0
          %362 = vmatprep.subr.bf16.mxu0 0
          %363 = vmatpush1.bf16.msra.mxu0 0
          %364 = vmatprep.subr.bf16.mxu0 0
          %365 = vmatpush1.bf16.msra.mxu0 0
          %366 = vmatprep.subr.bf16.mxu0 0
          %367 = vmatpush1.bf16.msra.mxu0 0
          %368 = vmatprep.subr.bf16.mxu0 0
          %369 = vmatpush1.bf16.msra.mxu0 0
          %370 = vmatprep.subr.bf16.mxu0 0
          %371 = vmatpush1.bf16.msra.mxu0 0
          %372 = vmatprep.subr.bf16.mxu0 0
          %373 = vmatpush1.bf16.msra.mxu0 0
          %374 = vmatprep.subr.bf16.mxu0 0
          %375 = vmatpush1.bf16.msra.mxu0 0
          %376 = vmatprep.subr.bf16.mxu0 0
          %377 = vmatpush1.bf16.msra.mxu0 0
          %378 = vmatprep.subr.bf16.mxu0 0
          %379 = vmatpush1.bf16.msra.mxu0 0
          %380 = vmatprep.subr.bf16.mxu0 0
          %381 = vmatpush1.bf16.msra.mxu0 0
          %382 = vmatprep.subr.bf16.mxu0 0
          %383 = vmatpush1.bf16.msra.mxu0 0
          %384 = vmatprep.mubr.bf16.mxu0 0
          %385 = vmatmul.mubr.bf16.gmra.mrb[0].mxu0 %v350
          %v386 = vpop.f32.mrb[0].mxu0
          %v387 = vadd.f32 0.0, %v386
          %v388 = vpop.f32.mrb[0].mxu0
          %v389 = vpop.f32.mrb[0].mxu0
          %v390 = vpop.f32.mrb[0].mxu0
          %391 = vdwg.mxu0
          %v392 = vpack.c.bf16 %v387, %v387
          %vm393 = vcmask 60416
          %394 = vst.msk [vmem:[#allocation3] sm:$0xf] %vm393, %v392
          %v396 = vunpack.c.l.b16 %v392
          %v397 = vpack.c.b16 %v396, %v396
          %398 = vrot.lane.b32.xlu0 %v397, 96
          %v399 = vpop.permute.xlu0 %398
          %401 = vst.msk [vmem:[#allocation4] sm:$0xf] %vm393, %v399
          %402 = vrot.lane.b32.xlu0 %v397, 120
          %v403 = vpop.permute.xlu0 %402
          %s405 = scalar_lea.vmem [#allocation3], 4
          %406 = vst.msk [vmem:[%s405] sm:$0xf] %vm393, %v403
          %407 = vrot.lane.b32.xlu0 %v397, 88
          %v408 = vpop.permute.xlu0 %407
          %s410 = scalar_lea.vmem [#allocation4], 4
          %411 = vst.msk [vmem:[%s410] sm:$0xf] %vm393, %v408
          %412 = vrot.lane.b32.xlu0 %v397, 112
          %v413 = vpop.permute.xlu0 %412
          %s415 = scalar_lea.vmem [#allocation3], 8
          %416 = vst.msk [vmem:[%s415] sm:$0xf] %vm393, %v413
          %417 = vrot.lane.b32.xlu0 %v397, 80
          %v418 = vpop.permute.xlu0 %417
          %s420 = scalar_lea.vmem [#allocation4], 8
          %421 = vst.msk [vmem:[%s420] sm:$0xf] %vm393, %v418
          %422 = vrot.lane.b32.xlu0 %v397, 104
          %v423 = vpop.permute.xlu0 %422
          %s425 = scalar_lea.vmem [#allocation3], 12
          %426 = vst.msk [vmem:[%s425] sm:$0xf] %vm393, %v423
          %427 = vrot.lane.b32.xlu0 %v397, 72
          %v428 = vpop.permute.xlu0 %427
          %s430 = scalar_lea.vmem [#allocation4], 12
          %431 = vst.msk [vmem:[%s430] sm:$0xf] %vm393, %v428
          %s432 = sshll.u32 %s344, 4
          %433 = dma.done [#allocation8], %s432
          %s434 = sshll.u32 %s344, 4
          %435 = dma.done %s296, %s434
        $region56: #{tpu_custom_call.1} parent=35 // pred_fallthru
          _
        %s436 = smul.u32 %s31, 8
        %s437 = sshra.s32 %s436, 3
        %s438 = sand.u32 %s436, 7
        %s439 = smul.addr %s437, 4
        %s440 = scalar_lea.vmem [#allocation2], %s439
        %v441 = vld [vmem:[%s440] sm:$0xf]
        %v442 = vld [vmem:[#allocation5] sm:$0xff]
        %v443 = vld [vmem:[#allocation5 + $0x8] sm:$0xff]
        %vm444 = vcmask 261120
        %v446 = vsel %vm444, %v441, 0
        %448 = vmatprep.subr.bf16.mxu0 0
        %449 = vmatpush1.bf16.msra.mxu0 %v442
        %450 = vmatprep.subr.bf16.mxu0 0
        %451 = vmatpush1.bf16.msra.mxu0 %v443
        %452 = vmatprep.subr.bf16.mxu0 0
        %453 = vmatpush1.bf16.msra.mxu0 0
        %454 = vmatprep.subr.bf16.mxu0 0
        %455 = vmatpush1.bf16.msra.mxu0 0
        %456 = vmatprep.subr.bf16.mxu0 0
        %457 = vmatpush1.bf16.msra.mxu0 0
        %458 = vmatprep.subr.bf16.mxu0 0
        %459 = vmatpush1.bf16.msra.mxu0 0
        %460 = vmatprep.subr.bf16.mxu0 0
        %461 = vmatpush1.bf16.msra.mxu0 0
        %462 = vmatprep.subr.bf16.mxu0 0
        %463 = vmatpush1.bf16.msra.mxu0 0
        %464 = vmatprep.subr.bf16.mxu0 0
        %465 = vmatpush1.bf16.msra.mxu0 0
        %466 = vmatprep.subr.bf16.mxu0 0
        %467 = vmatpush1.bf16.msra.mxu0 0
        %468 = vmatprep.subr.bf16.mxu0 0
        %469 = vmatpush1.bf16.msra.mxu0 0
        %470 = vmatprep.subr.bf16.mxu0 0
        %471 = vmatpush1.bf16.msra.mxu0 0
        %472 = vmatprep.subr.bf16.mxu0 0
        %473 = vmatpush1.bf16.msra.mxu0 0
        %474 = vmatprep.subr.bf16.mxu0 0
        %475 = vmatpush1.bf16.msra.mxu0 0
        %476 = vmatprep.subr.bf16.mxu0 0
        %477 = vmatpush1.bf16.msra.mxu0 0
        %478 = vmatprep.subr.bf16.mxu0 0
        %479 = vmatpush1.bf16.msra.mxu0 0
        %480 = vmatprep.mubr.bf16.mxu0 0
        %481 = vmatmul.mubr.bf16.gmra.mrb[0].mxu0 %v446
        %v482 = vpop.f32.mrb[0].mxu0
        %v483 = vadd.f32 0.0, %v482
        %v484 = vpop.f32.mrb[0].mxu0
        %v485 = vpop.f32.mrb[0].mxu0
        %v486 = vpop.f32.mrb[0].mxu0
        %487 = vdwg.mxu0
        %v488 = vpack.c.bf16 %v483, %v483
        %490 = vrot.lane.b32.xlu0 %v488, 120
        %v491 = vpop.permute.xlu0 %490
        %492 = vrot.lane.b32.xlu0 %v488, 112
        %v493 = vpop.permute.xlu0 %492
        %494 = vrot.lane.b32.xlu0 %v488, 104
        %v495 = vpop.permute.xlu0 %494
        %v496 = vld [vmem:[#allocation3] sm:$0xf]
        %v497 = vld [vmem:[#allocation3 + $0x4] sm:$0xf]
        %v498 = vld [vmem:[#allocation3 + $0x8] sm:$0xf]
        %v499 = vld [vmem:[#allocation3 + $0xc] sm:$0xf]
        %v500 = vld [vmem:[#allocation4] sm:$0xf]
        %v501 = vld [vmem:[#allocation4 + $0x4] sm:$0xf]
        %v502 = vld [vmem:[#allocation4 + $0x8] sm:$0xf]
        %v503 = vld [vmem:[#allocation4 + $0xc] sm:$0xf]
        %vm504 = vcmask 64512
        %v506 = vsel %vm504, %v488, 0
        %v509 = vsel %vm504, %v496, 0
        %511 = vmatprep.subr.bf16.mxu0 0
        %512 = vmatpush1.bf16.xpose.msra.mxu0 %v509
        %513 = vmatprep.subr.bf16.mxu0 0
        %514 = vmatpush1.bf16.xpose.msra.mxu0 0
        %515 = vmatprep.subr.bf16.mxu0 0
        %516 = vmatpush1.bf16.xpose.msra.mxu0 0
        %517 = vmatprep.subr.bf16.mxu0 0
        %518 = vmatpush1.bf16.xpose.msra.mxu0 0
        %519 = vmatprep.subr.bf16.mxu0 0
        %520 = vmatpush1.bf16.xpose.msra.mxu0 0
        %521 = vmatprep.subr.bf16.mxu0 0
        %522 = vmatpush1.bf16.xpose.msra.mxu0 0
        %523 = vmatprep.subr.bf16.mxu0 0
        %524 = vmatpush1.bf16.xpose.msra.mxu0 0
        %525 = vmatprep.subr.bf16.mxu0 0
        %526 = vmatpush1.bf16.xpose.msra.mxu0 0
        %527 = vmatprep.subr.bf16.mxu0 0
        %528 = vmatpush1.bf16.xpose.msra.mxu0 0
        %529 = vmatprep.subr.bf16.mxu0 0
        %530 = vmatpush1.bf16.xpose.msra.mxu0 0
        %531 = vmatprep.subr.bf16.mxu0 0
        %532 = vmatpush1.bf16.xpose.msra.mxu0 0
        %533 = vmatprep.subr.bf16.mxu0 0
        %534 = vmatpush1.bf16.xpose.msra.mxu0 0
        %535 = vmatprep.subr.bf16.mxu0 0
        %536 = vmatpush1.bf16.xpose.msra.mxu0 0
        %537 = vmatprep.subr.bf16.mxu0 0
        %538 = vmatpush1.bf16.xpose.msra.mxu0 0
        %539 = vmatprep.subr.bf16.mxu0 0
        %540 = vmatpush1.bf16.xpose.msra.mxu0 0
        %541 = vmatprep.subr.bf16.mxu0 0
        %542 = vmatpush1.bf16.xpose.msra.mxu0 0
        %543 = vmatprep.mubr.bf16.mxu0 0
        %544 = vmatmul.mubr.bf16.gmra.mrb[0].mxu0 %v506
        %v545 = vpop.f32.mrb[0].mxu0
        %v546 = vadd.f32 0.0, %v545
        %v547 = vpop.f32.mrb[0].mxu0
        %v548 = vpop.f32.mrb[0].mxu0
        %v549 = vpop.f32.mrb[0].mxu0
        %550 = vdwg.mxu0
        %v552 = vsel %vm504, %v491, 0
        %v555 = vsel %vm504, %v497, 0
        %557 = vmatprep.subr.bf16.mxu0 0
        %558 = vmatpush1.bf16.xpose.msra.mxu0 %v555
        %559 = vmatprep.subr.bf16.mxu0 0
        %560 = vmatpush1.bf16.xpose.msra.mxu0 0
        %561 = vmatprep.subr.bf16.mxu0 0
        %562 = vmatpush1.bf16.xpose.msra.mxu0 0
        %563 = vmatprep.subr.bf16.mxu0 0
        %564 = vmatpush1.bf16.xpose.msra.mxu0 0
        %565 = vmatprep.subr.bf16.mxu0 0
        %566 = vmatpush1.bf16.xpose.msra.mxu0 0
        %567 = vmatprep.subr.bf16.mxu0 0
        %568 = vmatpush1.bf16.xpose.msra.mxu0 0
        %569 = vmatprep.subr.bf16.mxu0 0
        %570 = vmatpush1.bf16.xpose.msra.mxu0 0
        %571 = vmatprep.subr.bf16.mxu0 0
        %572 = vmatpush1.bf16.xpose.msra.mxu0 0
        %573 = vmatprep.subr.bf16.mxu0 0
        %574 = vmatpush1.bf16.xpose.msra.mxu0 0
        %575 = vmatprep.subr.bf16.mxu0 0
        %576 = vmatpush1.bf16.xpose.msra.mxu0 0
        %577 = vmatprep.subr.bf16.mxu0 0
        %578 = vmatpush1.bf16.xpose.msra.mxu0 0
        %579 = vmatprep.subr.bf16.mxu0 0
        %580 = vmatpush1.bf16.xpose.msra.mxu0 0
        %581 = vmatprep.subr.bf16.mxu0 0
        %582 = vmatpush1.bf16.xpose.msra.mxu0 0
        %583 = vmatprep.subr.bf16.mxu0 0
        %584 = vmatpush1.bf16.xpose.msra.mxu0 0
        %585 = vmatprep.subr.bf16.mxu0 0
        %586 = vmatpush1.bf16.xpose.msra.mxu0 0
        %587 = vmatprep.subr.bf16.mxu0 0
        %588 = vmatpush1.bf16.xpose.msra.mxu0 0
        %589 = vmatprep.mubr.bf16.mxu0 0
        %590 = vmatmul.mubr.bf16.gmra.mrb[0].mxu0 %v552
        %v591 = vpop.f32.mrb[0].mxu0
        %v592 = vadd.f32 0.0, %v591
        %v593 = vpop.f32.mrb[0].mxu0
        %v594 = vpop.f32.mrb[0].mxu0
        %v595 = vpop.f32.mrb[0].mxu0
        %596 = vdwg.mxu0
        %v598 = vsel %vm504, %v493, 0
        %v601 = vsel %vm504, %v498, 0
        %603 = vmatprep.subr.bf16.mxu0 0
        %604 = vmatpush1.bf16.xpose.msra.mxu0 %v601
        %605 = vmatprep.subr.bf16.mxu0 0
        %606 = vmatpush1.bf16.xpose.msra.mxu0 0
        %607 = vmatprep.subr.bf16.mxu0 0
        %608 = vmatpush1.bf16.xpose.msra.mxu0 0
        %609 = vmatprep.subr.bf16.mxu0 0
        %610 = vmatpush1.bf16.xpose.msra.mxu0 0
        %611 = vmatprep.subr.bf16.mxu0 0
        %612 = vmatpush1.bf16.xpose.msra.mxu0 0
        %613 = vmatprep.subr.bf16.mxu0 0
        %614 = vmatpush1.bf16.xpose.msra.mxu0 0
        %615 = vmatprep.subr.bf16.mxu0 0
        %616 = vmatpush1.bf16.xpose.msra.mxu0 0
        %617 = vmatprep.subr.bf16.mxu0 0
        %618 = vmatpush1.bf16.xpose.msra.mxu0 0
        %619 = vmatprep.subr.bf16.mxu0 0
        %620 = vmatpush1.bf16.xpose.msra.mxu0 0
        %621 = vmatprep.subr.bf16.mxu0 0
        %622 = vmatpush1.bf16.xpose.msra.mxu0 0
        %623 = vmatprep.subr.bf16.mxu0 0
        %624 = vmatpush1.bf16.xpose.msra.mxu0 0
        %625 = vmatprep.subr.bf16.mxu0 0
        %626 = vmatpush1.bf16.xpose.msra.mxu0 0
        %627 = vmatprep.subr.bf16.mxu0 0
        %628 = vmatpush1.bf16.xpose.msra.mxu0 0
        %629 = vmatprep.subr.bf16.mxu0 0
        %630 = vmatpush1.bf16.xpose.msra.mxu0 0
        %631 = vmatprep.subr.bf16.mxu0 0
        %632 = vmatpush1.bf16.xpose.msra.mxu0 0
        %633 = vmatprep.subr.bf16.mxu0 0
        %634 = vmatpush1.bf16.xpose.msra.mxu0 0
        %635 = vmatprep.mubr.bf16.mxu0 0
        %636 = vmatmul.mubr.bf16.gmra.mrb[0].mxu0 %v598
        %v637 = vpop.f32.mrb[0].mxu0
        %v638 = vadd.f32 0.0, %v637
        %v639 = vpop.f32.mrb[0].mxu0
        %v640 = vpop.f32.mrb[0].mxu0
        %v641 = vpop.f32.mrb[0].mxu0
        %642 = vdwg.mxu0
        %v644 = vsel %vm504, %v495, 0
        %v647 = vsel %vm504, %v499, 0
        %649 = vmatprep.subr.bf16.mxu0 0
        %650 = vmatpush1.bf16.xpose.msra.mxu0 %v647
        %651 = vmatprep.subr.bf16.mxu0 0
        %652 = vmatpush1.bf16.xpose.msra.mxu0 0
        %653 = vmatprep.subr.bf16.mxu0 0
        %654 = vmatpush1.bf16.xpose.msra.mxu0 0
        %655 = vmatprep.subr.bf16.mxu0 0
        %656 = vmatpush1.bf16.xpose.msra.mxu0 0
        %657 = vmatprep.subr.bf16.mxu0 0
        %658 = vmatpush1.bf16.xpose.msra.mxu0 0
        %659 = vmatprep.subr.bf16.mxu0 0
        %660 = vmatpush1.bf16.xpose.msra.mxu0 0
        %661 = vmatprep.subr.bf16.mxu0 0
        %662 = vmatpush1.bf16.xpose.msra.mxu0 0
        %663 = vmatprep.subr.bf16.mxu0 0
        %664 = vmatpush1.bf16.xpose.msra.mxu0 0
        %665 = vmatprep.subr.bf16.mxu0 0
        %666 = vmatpush1.bf16.xpose.msra.mxu0 0
        %667 = vmatprep.subr.bf16.mxu0 0
        %668 = vmatpush1.bf16.xpose.msra.mxu0 0
        %669 = vmatprep.subr.bf16.mxu0 0
        %670 = vmatpush1.bf16.xpose.msra.mxu0 0
        %671 = vmatprep.subr.bf16.mxu0 0
        %672 = vmatpush1.bf16.xpose.msra.mxu0 0
        %673 = vmatprep.subr.bf16.mxu0 0
        %674 = vmatpush1.bf16.xpose.msra.mxu0 0
        %675 = vmatprep.subr.bf16.mxu0 0
        %676 = vmatpush1.bf16.xpose.msra.mxu0 0
        %677 = vmatprep.subr.bf16.mxu0 0
        %678 = vmatpush1.bf16.xpose.msra.mxu0 0
        %679 = vmatprep.subr.bf16.mxu0 0
        %680 = vmatpush1.bf16.xpose.msra.mxu0 0
        %681 = vmatprep.mubr.bf16.mxu0 0
        %682 = vmatmul.mubr.bf16.gmra.mrb[0].mxu0 %v644
        %v683 = vpop.f32.mrb[0].mxu0
        %v684 = vadd.f32 0.0, %v683
        %v685 = vpop.f32.mrb[0].mxu0
        %v686 = vpop.f32.mrb[0].mxu0
        %v687 = vpop.f32.mrb[0].mxu0
        %688 = vdwg.mxu0
        %v689 = vsel %vm504, %v546, -inf
        %690 = vmax.xlane.f32.xlu0 %v689
        %v691 = vpop.xlane.xlu0 %690
        %v692 = vsel %vm504, %v592, -inf
        %693 = vmax.xlane.f32.xlu0 %v692
        %v694 = vpop.xlane.xlu0 %693
        %v695 = vsel %vm504, %v638, -inf
        %696 = vmax.xlane.f32.xlu0 %v695
        %v697 = vpop.xlane.xlu0 %696
        %v698 = vsel %vm504, %v684, -inf
        %699 = vmax.xlane.f32.xlu0 %v698
        %v700 = vpop.xlane.xlu0 %699
        %v701 = vsub.f32 -inf, %v691
        %v702 = vsub.f32 -inf, %v694
        %v703 = vsub.f32 -inf, %v697
        %v704 = vsub.f32 -inf, %v700
        %v705 = vmul.f32 %v701, 1.442695
        %v706 = vpow.pop %v705
        %v707 = vmul.f32 %v702, 1.442695
        %v708 = vpow.pop %v707
        %v709 = vmul.f32 %v703, 1.442695
        %v710 = vpow.pop %v709
        %v711 = vmul.f32 %v704, 1.442695
        %v712 = vpow.pop %v711
        %v713 = vsub.f32 %v546, %v691
        %v714 = vsub.f32 %v592, %v694
        %v715 = vsub.f32 %v638, %v697
        %v716 = vsub.f32 %v684, %v700
        %v717 = vmul.f32 %v713, 1.442695
        %v718 = vpow.pop %v717
        %v719 = vmul.f32 %v714, 1.442695
        %v720 = vpow.pop %v719
        %v721 = vmul.f32 %v715, 1.442695
        %v722 = vpow.pop %v721
        %v723 = vmul.f32 %v716, 1.442695
        %v724 = vpow.pop %v723
        %v725 = vmul.f32 %v706, 0.0
        %v726 = vmul.f32 %v708, 0.0
        %v727 = vmul.f32 %v710, 0.0
        %v728 = vmul.f32 %v712, 0.0
        %v729 = vsel %vm504, %v718, 0.0
        %730 = vadd.xlane.f32.xlu0 %v729
        %v731 = vpop.xlane.xlu0 %730
        %v732 = vsel %vm504, %v720, 0.0
        %733 = vadd.xlane.f32.xlu0 %v732
        %v734 = vpop.xlane.xlu0 %733
        %v735 = vsel %vm504, %v722, 0.0
        %736 = vadd.xlane.f32.xlu0 %v735
        %v737 = vpop.xlane.xlu0 %736
        %v738 = vsel %vm504, %v724, 0.0
        %739 = vadd.xlane.f32.xlu0 %v738
        %v740 = vpop.xlane.xlu0 %739
        %v741 = vadd.f32 %v725, %v731
        %v742 = vadd.f32 %v726, %v734
        %v743 = vadd.f32 %v727, %v737
        %v744 = vadd.f32 %v728, %v740
        %v745 = vpack.c.bf16 %v718, %v718
        %v746 = vpack.c.bf16 %v720, %v720
        %v747 = vpack.c.bf16 %v722, %v722
        %v748 = vpack.c.bf16 %v724, %v724
        %v750 = vsel %vm504, %v745, 0
        %vm752 = vcmask 1043456
        %v754 = vsel %vm752, %v500, 0
        %756 = vmatprep.subr.bf16.mxu0 0
        %757 = vmatpush1.bf16.msra.mxu0 %v754
        %758 = vmatprep.subr.bf16.mxu0 0
        %759 = vmatpush1.bf16.msra.mxu0 0
        %760 = vmatprep.subr.bf16.mxu0 0
        %761 = vmatpush1.bf16.msra.mxu0 0
        %762 = vmatprep.subr.bf16.mxu0 0
        %763 = vmatpush1.bf16.msra.mxu0 0
        %764 = vmatprep.subr.bf16.mxu0 0
        %765 = vmatpush1.bf16.msra.mxu0 0
        %766 = vmatprep.subr.bf16.mxu0 0
        %767 = vmatpush1.bf16.msra.mxu0 0
        %768 = vmatprep.subr.bf16.mxu0 0
        %769 = vmatpush1.bf16.msra.mxu0 0
        %770 = vmatprep.subr.bf16.mxu0 0
        %771 = vmatpush1.bf16.msra.mxu0 0
        %772 = vmatprep.subr.bf16.mxu0 0
        %773 = vmatpush1.bf16.msra.mxu0 0
        %774 = vmatprep.subr.bf16.mxu0 0
        %775 = vmatpush1.bf16.msra.mxu0 0
        %776 = vmatprep.subr.bf16.mxu0 0
        %777 = vmatpush1.bf16.msra.mxu0 0
        %778 = vmatprep.subr.bf16.mxu0 0
        %779 = vmatpush1.bf16.msra.mxu0 0
        %780 = vmatprep.subr.bf16.mxu0 0
        %781 = vmatpush1.bf16.msra.mxu0 0
        %782 = vmatprep.subr.bf16.mxu0 0
        %783 = vmatpush1.bf16.msra.mxu0 0
        %784 = vmatprep.subr.bf16.mxu0 0
        %785 = vmatpush1.bf16.msra.mxu0 0
        %786 = vmatprep.subr.bf16.mxu0 0
        %787 = vmatpush1.bf16.msra.mxu0 0
        %788 = vmatprep.mubr.bf16.mxu0 0
        %789 = vmatmul.mubr.bf16.gmra.mrb[0].mxu0 %v750
        %v790 = vpop.f32.mrb[0].mxu0
        %v791 = vadd.f32 0.0, %v790
        %v792 = vpop.f32.mrb[0].mxu0
        %v793 = vpop.f32.mrb[0].mxu0
        %v794 = vpop.f32.mrb[0].mxu0
        %795 = vdwg.mxu0
        %v797 = vsel %vm504, %v746, 0
        %v800 = vsel %vm752, %v501, 0
        %802 = vmatprep.subr.bf16.mxu0 0
        %803 = vmatpush1.bf16.msra.mxu0 %v800
        %804 = vmatprep.subr.bf16.mxu0 0
        %805 = vmatpush1.bf16.msra.mxu0 0
        %806 = vmatprep.subr.bf16.mxu0 0
        %807 = vmatpush1.bf16.msra.mxu0 0
        %808 = vmatprep.subr.bf16.mxu0 0
        %809 = vmatpush1.bf16.msra.mxu0 0
        %810 = vmatprep.subr.bf16.mxu0 0
        %811 = vmatpush1.bf16.msra.mxu0 0
        %812 = vmatprep.subr.bf16.mxu0 0
        %813 = vmatpush1.bf16.msra.mxu0 0
        %814 = vmatprep.subr.bf16.mxu0 0
        %815 = vmatpush1.bf16.msra.mxu0 0
        %816 = vmatprep.subr.bf16.mxu0 0
        %817 = vmatpush1.bf16.msra.mxu0 0
        %818 = vmatprep.subr.bf16.mxu0 0
        %819 = vmatpush1.bf16.msra.mxu0 0
        %820 = vmatprep.subr.bf16.mxu0 0
        %821 = vmatpush1.bf16.msra.mxu0 0
        %822 = vmatprep.subr.bf16.mxu0 0
        %823 = vmatpush1.bf16.msra.mxu0 0
        %824 = vmatprep.subr.bf16.mxu0 0
        %825 = vmatpush1.bf16.msra.mxu0 0
        %826 = vmatprep.subr.bf16.mxu0 0
        %827 = vmatpush1.bf16.msra.mxu0 0
        %828 = vmatprep.subr.bf16.mxu0 0
        %829 = vmatpush1.bf16.msra.mxu0 0
        %830 = vmatprep.subr.bf16.mxu0 0
        %831 = vmatpush1.bf16.msra.mxu0 0
        %832 = vmatprep.subr.bf16.mxu0 0
        %833 = vmatpush1.bf16.msra.mxu0 0
        %834 = vmatprep.mubr.bf16.mxu0 0
        %835 = vmatmul.mubr.bf16.gmra.mrb[0].mxu0 %v797
        %v836 = vpop.f32.mrb[0].mxu0
        %v837 = vadd.f32 0.0, %v836
        %v838 = vpop.f32.mrb[0].mxu0
        %v839 = vpop.f32.mrb[0].mxu0
        %v840 = vpop.f32.mrb[0].mxu0
        %841 = vdwg.mxu0
        %v843 = vsel %vm504, %v747, 0
        %v846 = vsel %vm752, %v502, 0
        %848 = vmatprep.subr.bf16.mxu0 0
        %849 = vmatpush1.bf16.msra.mxu0 %v846
        %850 = vmatprep.subr.bf16.mxu0 0
        %851 = vmatpush1.bf16.msra.mxu0 0
        %852 = vmatprep.subr.bf16.mxu0 0
        %853 = vmatpush1.bf16.msra.mxu0 0
        %854 = vmatprep.subr.bf16.mxu0 0
        %855 = vmatpush1.bf16.msra.mxu0 0
        %856 = vmatprep.subr.bf16.mxu0 0
        %857 = vmatpush1.bf16.msra.mxu0 0
        %858 = vmatprep.subr.bf16.mxu0 0
        %859 = vmatpush1.bf16.msra.mxu0 0
        %860 = vmatprep.subr.bf16.mxu0 0
        %861 = vmatpush1.bf16.msra.mxu0 0
        %862 = vmatprep.subr.bf16.mxu0 0
        %863 = vmatpush1.bf16.msra.mxu0 0
        %864 = vmatprep.subr.bf16.mxu0 0
        %865 = vmatpush1.bf16.msra.mxu0 0
        %866 = vmatprep.subr.bf16.mxu0 0
        %867 = vmatpush1.bf16.msra.mxu0 0
        %868 = vmatprep.subr.bf16.mxu0 0
        %869 = vmatpush1.bf16.msra.mxu0 0
        %870 = vmatprep.subr.bf16.mxu0 0
        %871 = vmatpush1.bf16.msra.mxu0 0
        %872 = vmatprep.subr.bf16.mxu0 0
        %873 = vmatpush1.bf16.msra.mxu0 0
        %874 = vmatprep.subr.bf16.mxu0 0
        %875 = vmatpush1.bf16.msra.mxu0 0
        %876 = vmatprep.subr.bf16.mxu0 0
        %877 = vmatpush1.bf16.msra.mxu0 0
        %878 = vmatprep.subr.bf16.mxu0 0
        %879 = vmatpush1.bf16.msra.mxu0 0
        %880 = vmatprep.mubr.bf16.mxu0 0
        %881 = vmatmul.mubr.bf16.gmra.mrb[0].mxu0 %v843
        %v882 = vpop.f32.mrb[0].mxu0
        %v883 = vadd.f32 0.0, %v882
        %v884 = vpop.f32.mrb[0].mxu0
        %v885 = vpop.f32.mrb[0].mxu0
        %v886 = vpop.f32.mrb[0].mxu0
        %887 = vdwg.mxu0
        %v889 = vsel %vm504, %v748, 0
        %v892 = vsel %vm752, %v503, 0
        %894 = vmatprep.subr.bf16.mxu0 0
        %895 = vmatpush1.bf16.msra.mxu0 %v892
        %896 = vmatprep.subr.bf16.mxu0 0
        %897 = vmatpush1.bf16.msra.mxu0 0
        %898 = vmatprep.subr.bf16.mxu0 0
        %899 = vmatpush1.bf16.msra.mxu0 0
        %900 = vmatprep.subr.bf16.mxu0 0
        %901 = vmatpush1.bf16.msra.mxu0 0
        %902 = vmatprep.subr.bf16.mxu0 0
        %903 = vmatpush1.bf16.msra.mxu0 0
        %904 = vmatprep.subr.bf16.mxu0 0
        %905 = vmatpush1.bf16.msra.mxu0 0
        %906 = vmatprep.subr.bf16.mxu0 0
        %907 = vmatpush1.bf16.msra.mxu0 0
        %908 = vmatprep.subr.bf16.mxu0 0
        %909 = vmatpush1.bf16.msra.mxu0 0
        %910 = vmatprep.subr.bf16.mxu0 0
        %911 = vmatpush1.bf16.msra.mxu0 0
        %912 = vmatprep.subr.bf16.mxu0 0
        %913 = vmatpush1.bf16.msra.mxu0 0
        %914 = vmatprep.subr.bf16.mxu0 0
        %915 = vmatpush1.bf16.msra.mxu0 0
        %916 = vmatprep.subr.bf16.mxu0 0
        %917 = vmatpush1.bf16.msra.mxu0 0
        %918 = vmatprep.subr.bf16.mxu0 0
        %919 = vmatpush1.bf16.msra.mxu0 0
        %920 = vmatprep.subr.bf16.mxu0 0
        %921 = vmatpush1.bf16.msra.mxu0 0
        %922 = vmatprep.subr.bf16.mxu0 0
        %923 = vmatpush1.bf16.msra.mxu0 0
        %924 = vmatprep.subr.bf16.mxu0 0
        %925 = vmatpush1.bf16.msra.mxu0 0
        %926 = vmatprep.mubr.bf16.mxu0 0
        %927 = vmatmul.mubr.bf16.gmra.mrb[0].mxu0 %v889
        %v928 = vpop.f32.mrb[0].mxu0
        %v929 = vadd.f32 0.0, %v928
        %v930 = vpop.f32.mrb[0].mxu0
        %v931 = vpop.f32.mrb[0].mxu0
        %v932 = vpop.f32.mrb[0].mxu0
        %933 = vdwg.mxu0
        %v934 = vadd.f32 %v725, %v791
        %v935 = vadd.f32 %v726, %v837
        %v936 = vadd.f32 %v727, %v883
        %v937 = vadd.f32 %v728, %v929
        %v938 = vrcp.pop %v741
        %v939 = vrcp.pop %v742
        %v940 = vrcp.pop %v743
        %v941 = vrcp.pop %v744
        %v942 = vmul.f32 %v934, %v938
        %v943 = vmul.f32 %v935, %v939
        %v944 = vmul.f32 %v936, %v940
        %v945 = vmul.f32 %v937, %v941
        %v946 = vpack.c.bf16 %v942, %v942
        %v947 = vpack.c.bf16 %v943, %v943
        %v948 = vpack.c.bf16 %v944, %v944
        %v949 = vpack.c.bf16 %v945, %v945
        %951 = vrot.lane.b32.xlu0 %v947, 8
        %v952 = vpop.permute.xlu0 %951
        %954 = vrot.lane.b32.xlu0 %v948, 16
        %v955 = vpop.permute.xlu0 %954
        %957 = vrot.lane.b32.xlu0 %v949, 24
        %v958 = vpop.permute.xlu0 %957
        %v961 = vsel %vm504, %v946, %v952
        %vm962 = vcmask 130048
        %v964 = vsel %vm962, %v961, %v955
        %vm965 = vcmask 195584
        %v967 = vsel %vm965, %v964, %v958
        %v968 = vld [vmem:[#allocation7] sm:$0xff]
        %v969 = vld [vmem:[#allocation7 + $0x8] sm:$0xff]
        %v970 = vld [vmem:[#allocation15] sm:$0x1]
        %v972 = vlaneseq
        %v973 = vshrl.u32 %v972, 7
        %v974 = vsub.s32 0, %v973
        %v975 = vrot.slane %v970, %v974
        %v977 = vsel %vm444, %v967, 0
        %979 = vmatprep.subr.bf16.mxu0 0
        %980 = vmatpush1.bf16.msra.mxu0 %v968
        %981 = vmatprep.subr.bf16.mxu0 0
        %982 = vmatpush1.bf16.msra.mxu0 %v969
        %983 = vmatprep.subr.bf16.mxu0 0
        %984 = vmatpush1.bf16.msra.mxu0 0
        %985 = vmatprep.subr.bf16.mxu0 0
        %986 = vmatpush1.bf16.msra.mxu0 0
        %987 = vmatprep.subr.bf16.mxu0 0
        %988 = vmatpush1.bf16.msra.mxu0 0
        %989 = vmatprep.subr.bf16.mxu0 0
        %990 = vmatpush1.bf16.msra.mxu0 0
        %991 = vmatprep.subr.bf16.mxu0 0
        %992 = vmatpush1.bf16.msra.mxu0 0
        %993 = vmatprep.subr.bf16.mxu0 0
        %994 = vmatpush1.bf16.msra.mxu0 0
        %995 = vmatprep.subr.bf16.mxu0 0
        %996 = vmatpush1.bf16.msra.mxu0 0
        %997 = vmatprep.subr.bf16.mxu0 0
        %998 = vmatpush1.bf16.msra.mxu0 0
        %999 = vmatprep.subr.bf16.mxu0 0
        %1000 = vmatpush1.bf16.msra.mxu0 0
        %1001 = vmatprep.subr.bf16.mxu0 0
        %1002 = vmatpush1.bf16.msra.mxu0 0
        %1003 = vmatprep.subr.bf16.mxu0 0
        %1004 = vmatpush1.bf16.msra.mxu0 0
        %1005 = vmatprep.subr.bf16.mxu0 0
        %1006 = vmatpush1.bf16.msra.mxu0 0
        %1007 = vmatprep.subr.bf16.mxu0 0
        %1008 = vmatpush1.bf16.msra.mxu0 0
        %1009 = vmatprep.subr.bf16.mxu0 0
        %1010 = vmatpush1.bf16.msra.mxu0 0
        %1011 = vmatprep.mubr.bf16.mxu0 0
        %1012 = vmatmul.mubr.bf16.gmra.mrb[0].mxu0 %v977
        %v1013 = vpop.f32.mrb[0].mxu0
        %v1014 = vadd.f32 %v975, %v1013
        %v1015 = vpop.f32.mrb[0].mxu0
        %v1016 = vpop.f32.mrb[0].mxu0
        %v1017 = vpop.f32.mrb[0].mxu0
        %1018 = vdwg.mxu0
        %1019 = vst.msk [vmem:[%s267] sm:$0xff] %vm444, %v1014
        %s1020 = sand.u32 %s137, 1
        %s1021 = scalar_lea.sflag [#allocation11], %s1020
        %s1022 = sand.u32 %s137, 1
        %s1023 = smul.addr %s1022, 8
        %s1024 = scalar_lea.vmem [#allocation17], %s1023
        // Predicated region
        $region69: #{tpu_custom_call.1} parent=35 // pred_check
          %p1025 = pneg %p147
        $region70: #{tpu_custom_call.1} parent=35 // pred_check_branch
          %1027 = sbr.rel (%p1025) target = $region72
        $region71: #{tpu_custom_call.1} parent=35 // pred_region
          %s1029 = ssub.s32 128, 128
          %1030 = vsyncadd %s1021, %s1029
          %s1031 = sadd.s32 %s31, %s30
          %s1032 = smul.addr %s1031, 128
          %s1033 = scalar_lea.hbm %s7, %s1032
          %s1035 = sshll.u32 %s1024, 4
          %s1036 = int_to_ptr.vmem [resolvable:$true] %s1035
          %1038 = dma.vmem_to_hbm [thread:$0]  %s1036, 128, %s1033, %s1021
        $region72: #{tpu_custom_call.1} parent=35 // pred_fallthru
          _
      $region36: #{tpu_custom_call.1} parent=5 // pred_fallthru
        _
      %p1039 = scmp.le.s32.totalorder 2, %s21
      // Predicated region
      $region73: #{tpu_custom_call.1} parent=5 // pred_check
        %p1040 = pneg %p1039
      $region74: #{tpu_custom_call.1} parent=5 // pred_check_branch
        %1042 = sbr.rel (%p1040) target = $region76
      $region75: #{tpu_custom_call.1} parent=5 // pred_region
        %s1043 = ssub.s32 %s21, 2
        // Predicated region
        $region77: #{tpu_custom_call.1} parent=75 // pred_check
          %p1044 = pneg %p153
        $region78: #{tpu_custom_call.1} parent=75 // pred_check_branch
          %1046 = sbr.rel (%p1044) target = $region80
        $region79: #{tpu_custom_call.1} parent=75 // pred_region
          %s1047 = sand.u32 %s138, 1
          %s1048 = scalar_lea.sflag [#allocation11], %s1047
          %s1049 = sand.u32 %s138, 1
          %s1050 = smul.addr %s1049, 8
          %s1051 = scalar_lea.vmem [#allocation17], %s1050
          %1052 = dma.done %s1048, 128
        $region80: #{tpu_custom_call.1} parent=75 // pred_fallthru
          _
      $region76: #{tpu_custom_call.1} parent=5 // pred_fallthru
        _
    $region6: #{tpu_custom_call.1} parent=1 // loop_footer
      %s25 = sadd.s32 1, %s21
    $region7: #{tpu_custom_call.1} parent=1 // loop_footer_branch
      %20 = sbr.rel target = $region3
    $region8: #{tpu_custom_call.1} parent=1 // loop_exit
      _
    %1053 = vsyncpa [#allocation10], 1
    %s1054 = scalar_lea.sflag [#allocation10], 1
    %1055 = vsyncpa %s1054, 1
    %1056 = vsyncpa [#allocation13], 1
    %1057 = vsyncpa [#allocation16], 1
    %1058 = vsyncpa [#allocation11], 1
    %s1059 = scalar_lea.sflag [#allocation11], 1
    %1060 = vsyncpa %s1059, 1
  %1061 = vsyncmov [#allocation8]
  %s1062 = vpop.sfrf %1061
  %p1063 = scmp.eq.s32.totalorder %s1062, 0
  %p1064 = pneg %p1063
  %1066 = shalt.err (%p1064)
  %s1067 = scalar_lea.sflag [#allocation8], 1
  %1068 = vsyncmov %s1067
  %s1069 = vpop.sfrf %1068
  %p1070 = scmp.eq.s32.totalorder %s1069, 0
  %p1071 = pneg %p1070
  %1073 = shalt.err (%p1071)
  %s1074 = scalar_lea.sflag [#allocation8], 2
  %1075 = vsyncmov %s1074
  %s1076 = vpop.sfrf %1075
  %p1077 = scmp.eq.s32.totalorder %s1076, 0
  %p1078 = pneg %p1077
  %1080 = shalt.err (%p1078)

</llo_original>
